<compile_context>
chip_gen: v7x
topology: tpu7x:2x2x1
jax: 0.10.0
libtpu: 0.0.40
codegen_flags: <defaults>
</compile_context>

<pallas_src>
import math
import jax
import jax.numpy as jnp
from jax.experimental import pallas as pl
from jax.experimental.pallas import tpu as pltpu

# Small, module-consistent shapes.
B, S, D = 2, 8, 32          # batch, seq, d_model ("size" of EncoderLayer)
H = 4                       # attention heads
DK = D // H                 # per-head dim
DFF = 64                    # feed-forward hidden dim
EPS = 1e-6
BS = B * S                  # flattened rows


def encoder_layer_kernel(x_ref, bias_ref,
                         a1_ref, b1_ref,
                         wqkv_ref, bqkv_ref,
                         wo_ref, bo_ref,
                         a2_ref, b2_ref,
                         w1_ref, bf1_ref, w2_ref, bf2_ref,
                         o_ref):
    """Single grid step; the entire (B*S, D) batch is resident in VMEM."""
    x = x_ref[...]                                   # (B*S, D)

    def layer_norm(v, a, b):
        mean = jnp.mean(v, axis=-1, keepdims=True)
        # torch.std default is unbiased (n-1); the module divides by (std+eps)
        var = jnp.sum((v - mean) ** 2, axis=-1, keepdims=True) * (1.0 / (D - 1))
        std = jnp.sqrt(var)
        return a * (v - mean) / (std + EPS) + b

    # ---- sublayer 0: pre-norm + fused-QKV multi-head self-attn + residual ----
    xn = layer_norm(x, a1_ref[...], b1_ref[...])
    qkv = jnp.dot(xn, wqkv_ref[...], preferred_element_type=jnp.float32) + bqkv_ref[...]
    q = qkv[:, 0:D]            # already scaled by 1/sqrt(DK) (folded into wq/bq)
    k = qkv[:, D:2 * D]
    v = qkv[:, 2 * D:3 * D]

    attn_blocks = []
    for b in range(B):                               # static unroll over batch
        rows = slice(b * S, (b + 1) * S)
        qb, kb, vb = q[rows], k[rows], v[rows]
        bias = bias_ref[b]                           # (1, S): 0 = keep, -1e9 = masked
        attn_b = jnp.zeros((S, D), jnp.float32)
        for h in range(H):                           # static unroll over heads
            cols = slice(h * DK, (h + 1) * DK)
            qh, kh, vh = qb[:, cols], kb[:, cols], vb[:, cols]
            scores = jnp.dot(qh, kh.T, preferred_element_type=jnp.float32) + bias
            scores = scores - jnp.max(scores, axis=-1, keepdims=True)
            p = jnp.exp(scores)
            p = p * pl.reciprocal(jnp.sum(p, axis=-1, keepdims=True), approx=False)
            head = jnp.dot(p, vh, preferred_element_type=jnp.float32)
            # accumulate directly in output-projection space -> no head concat
            attn_b = attn_b + jnp.dot(head, wo_ref[h],
                                      preferred_element_type=jnp.float32)
        attn_blocks.append(attn_b)
    attn = jnp.concatenate(attn_blocks, axis=0) + bo_ref[...]   # (B*S, D)
    x1 = x + attn                                    # residual (dropout = identity)

    # ---- sublayer 1: pre-norm + position-wise feed-forward + residual ----
    xn2 = layer_norm(x1, a2_ref[...], b2_ref[...])
    h1 = jnp.maximum(
        jnp.dot(xn2, w1_ref[...], preferred_element_type=jnp.float32) + bf1_ref[...],
        0.0)
    ff = jnp.dot(h1, w2_ref[...], preferred_element_type=jnp.float32) + bf2_ref[...]

    o_ref[...] = x1 + ff


def encoder_layer(x, mask, params):
    (a1, b1, wq, bq, wk, bk, wv, bv, wo, bo, a2, b2, w1, bf1, w2, bf2) = params

    scale = 1.0 / math.sqrt(DK)
    # Fold attention scale into q's weights/bias, fuse Q/K/V into one matmul.
    wqkv = jnp.concatenate([wq * scale, wk, wv], axis=1)      # (D, 3D)
    bqkv = jnp.concatenate([bq * scale, bk, bv], axis=1)      # (1, 3D)
    wo_r = wo.reshape(H, DK, D)                               # per-head output proj
    bias = (mask - 1.0) * 1e9                                 # (B, 1, S) additive mask
    x2d = x.reshape(BS, D)

    vspec = lambda: pl.BlockSpec(memory_space=pltpu.MemorySpace.VMEM)
    out = pl.pallas_call(
        encoder_layer_kernel,
        out_shape=jax.ShapeDtypeStruct((BS, D), jnp.float32),
        in_specs=[vspec() for _ in range(14)],
        out_specs=vspec(),
    )(x2d, bias, a1, b1, wqkv, bqkv, wo_r, bo, a2, b2, w1, bf1, w2, bf2)
    return out.reshape(B, S, D)


def reference(x, mask, params):
    """Pure-JAX reference of the same forward pass (for a sanity check)."""
    (a1, b1, wq, bq, wk, bk, wv, bv, wo, bo, a2, b2, w1, bf1, w2, bf2) = params

    def ln(v, a, b):
        mean = jnp.mean(v, -1, keepdims=True)
        var = jnp.sum((v - mean) ** 2, -1, keepdims=True) / (D - 1)
        return a * (v - mean) / (jnp.sqrt(var) + EPS) + b

    xn = ln(x, a1, b1)
    q = xn @ wq + bq
    k = xn @ wk + bk
    v = xn @ wv + bv
    qh = q.reshape(B, S, H, DK).transpose(0, 2, 1, 3)
    kh = k.reshape(B, S, H, DK).transpose(0, 2, 1, 3)
    vh = v.reshape(B, S, H, DK).transpose(0, 2, 1, 3)
    sc = jnp.einsum("bhqd,bhkd->bhqk", qh, kh) / math.sqrt(DK)
    sc = jnp.where(mask[:, :, None, :] == 0, -1e9, sc)
    p = jax.nn.softmax(sc, axis=-1)
    oh = jnp.einsum("bhqk,bhkd->bhqd", p, vh).transpose(0, 2, 1, 3).reshape(B, S, D)
    x1 = x + (oh @ wo + bo)
    xn2 = ln(x1, a2, b2)
    return x1 + (jax.nn.relu(xn2 @ w1 + bf1) @ w2 + bf2)


def init_params(key):
    ks = jax.random.split(key, 8)
    sc = 0.05
    a1 = jnp.ones((1, D), jnp.float32)
    b1 = jnp.zeros((1, D), jnp.float32)
    a2 = jnp.ones((1, D), jnp.float32)
    b2 = jnp.zeros((1, D), jnp.float32)
    wq = sc * jax.random.normal(ks[0], (D, D), jnp.float32)
    wk = sc * jax.random.normal(ks[1], (D, D), jnp.float32)
    wv = sc * jax.random.normal(ks[2], (D, D), jnp.float32)
    wo = sc * jax.random.normal(ks[3], (D, D), jnp.float32)
    bq = sc * jax.random.normal(ks[4], (1, D), jnp.float32)
    bk = jnp.zeros((1, D), jnp.float32)
    bv = jnp.zeros((1, D), jnp.float32)
    bo = sc * jax.random.normal(ks[5], (1, D), jnp.float32)
    w1 = sc * jax.random.normal(ks[6], (D, DFF), jnp.float32)
    bf1 = jnp.zeros((1, DFF), jnp.float32)
    w2 = sc * jax.random.normal(ks[7], (DFF, D), jnp.float32)
    bf2 = jnp.zeros((1, D), jnp.float32)
    return (a1, b1, wq, bq, wk, bk, wv, bv, wo, bo, a2, b2, w1, bf1, w2, bf2)


if __name__ == "__main__":
    key = jax.random.PRNGKey(0)
    kx, kp = jax.random.split(key)
    x = jax.random.normal(kx, (B, S, D), jnp.float32)
    mask = jnp.ones((B, 1, S), jnp.float32)
    mask = mask.at[1, 0, S - 1].set(0.0)        # mask last key of batch 1
    params = init_params(kp)

    out = encoder_layer(x, mask, params)
    out = jax.block_until_ready(out)

    ref = reference(x, mask, params)
    assert out.shape == (B, S, D)
    assert jnp.allclose(out, ref, atol=1e-4, rtol=1e-4), "mismatch vs pure-JAX reference"
    print("KERNEL_OK")
</pallas_src>

<mosaic_0001>
module attributes {stable_mosaic.version = 11 : i64} {
  func.func @encoder_layer_kernel(%arg0: memref<16x32xf32, #tpu.memory_space<vmem>>, %arg1: memref<2x1x8xf32, #tpu.memory_space<vmem>>, %arg2: memref<1x32xf32, #tpu.memory_space<vmem>>, %arg3: memref<1x32xf32, #tpu.memory_space<vmem>>, %arg4: memref<32x96xf32, #tpu.memory_space<vmem>>, %arg5: memref<1x96xf32, #tpu.memory_space<vmem>>, %arg6: memref<4x8x32xf32, #tpu.memory_space<vmem>>, %arg7: memref<1x32xf32, #tpu.memory_space<vmem>>, %arg8: memref<1x32xf32, #tpu.memory_space<vmem>>, %arg9: memref<1x32xf32, #tpu.memory_space<vmem>>, %arg10: memref<32x64xf32, #tpu.memory_space<vmem>>, %arg11: memref<1x64xf32, #tpu.memory_space<vmem>>, %arg12: memref<64x32xf32, #tpu.memory_space<vmem>>, %arg13: memref<1x32xf32, #tpu.memory_space<vmem>>, %arg14: memref<16x32xf32, #tpu.memory_space<vmem>>) attributes {dimension_semantics = [], scalar_prefetch = 0 : i64, scratch_operands = 0 : i64, tpu.core_type = #tpu.core_type<tc>} {
    %c0 = arith.constant 0 : index
    %c0_0 = arith.constant 0 : index
    %0 = vector.load %arg0[%c0, %c0_0] : memref<16x32xf32, #tpu.memory_space<vmem>>, vector<16x32xf32>
    %c0_1 = arith.constant 0 : index
    %c0_2 = arith.constant 0 : index
    %1 = vector.load %arg2[%c0_1, %c0_2] : memref<1x32xf32, #tpu.memory_space<vmem>>, vector<1x32xf32>
    %c0_3 = arith.constant 0 : index
    %c0_4 = arith.constant 0 : index
    %2 = vector.load %arg3[%c0_3, %c0_4] : memref<1x32xf32, #tpu.memory_space<vmem>>, vector<1x32xf32>
    %cst = arith.constant dense<0.000000e+00> : vector<16xf32>
    %3 = vector.multi_reduction <add>, %0, %cst [1] : vector<16x32xf32> to vector<16xf32>
    %4 = vector.shape_cast %3 : vector<16xf32> to vector<16x1xf32>
    %cst_5 = arith.constant 3.200000e+01 : f32
    %5 = vector.broadcast %cst_5 : f32 to vector<16x1xf32>
    %6 = arith.divf %4, %5 : vector<16x1xf32>
    %7 = vector.broadcast %6 : vector<16x1xf32> to vector<16x32xf32>
    %8 = arith.subf %0, %7 : vector<16x32xf32>
    %9 = arith.mulf %8, %8 : vector<16x32xf32>
    %cst_6 = arith.constant dense<0.000000e+00> : vector<16xf32>
    %10 = vector.multi_reduction <add>, %9, %cst_6 [1] : vector<16x32xf32> to vector<16xf32>
    %11 = vector.shape_cast %10 : vector<16xf32> to vector<16x1xf32>
    %cst_7 = arith.constant 0.0322580636 : f32
    %12 = vector.broadcast %cst_7 : f32 to vector<16x1xf32>
    %13 = arith.mulf %11, %12 : vector<16x1xf32>
    %14 = math.sqrt %13 : vector<16x1xf32>
    %15 = vector.broadcast %6 : vector<16x1xf32> to vector<16x32xf32>
    %16 = arith.subf %0, %15 : vector<16x32xf32>
    %17 = vector.broadcast %1 : vector<1x32xf32> to vector<16x32xf32>
    %18 = arith.mulf %17, %16 : vector<16x32xf32>
    %cst_8 = arith.constant 9.99999997E-7 : f32
    %19 = vector.broadcast %cst_8 : f32 to vector<16x1xf32>
    %20 = arith.addf %14, %19 : vector<16x1xf32>
    %21 = vector.broadcast %20 : vector<16x1xf32> to vector<16x32xf32>
    %22 = arith.divf %18, %21 : vector<16x32xf32>
    %23 = vector.broadcast %2 : vector<1x32xf32> to vector<16x32xf32>
    %24 = arith.addf %22, %23 : vector<16x32xf32>
    %c0_9 = arith.constant 0 : index
    %c0_10 = arith.constant 0 : index
    %25 = vector.load %arg4[%c0_9, %c0_10] : memref<32x96xf32, #tpu.memory_space<vmem>>, vector<32x96xf32>
    %cst_11 = arith.constant dense<0.000000e+00> : vector<16x96xf32>
    %26 = tpu.matmul %24, %25, %cst_11 {dimension_numbers = #tpu.dot_dimension_numbers<[1], [0], [0], [1], [0, 0, 1, 1], [], []>} : vector<16x32xf32>, vector<32x96xf32>, vector<16x96xf32> -> vector<16x96xf32>
    %c0_12 = arith.constant 0 : index
    %c0_13 = arith.constant 0 : index
    %27 = vector.load %arg5[%c0_12, %c0_13] : memref<1x96xf32, #tpu.memory_space<vmem>>, vector<1x96xf32>
    %28 = vector.broadcast %27 : vector<1x96xf32> to vector<16x96xf32>
    %29 = arith.addf %26, %28 : vector<16x96xf32>
    %30 = vector.extract_strided_slice %29 {offsets = [0, 0], sizes = [16, 32], strides = [1, 1]} : vector<16x96xf32> to vector<16x32xf32>
    %31 = vector.extract_strided_slice %29 {offsets = [0, 32], sizes = [16, 32], strides = [1, 1]} : vector<16x96xf32> to vector<16x32xf32>
    %32 = vector.extract_strided_slice %29 {offsets = [0, 64], sizes = [16, 32], strides = [1, 1]} : vector<16x96xf32> to vector<16x32xf32>
    %33 = vector.extract_strided_slice %30 {offsets = [0, 0], sizes = [8, 32], strides = [1, 1]} : vector<16x32xf32> to vector<8x32xf32>
    %34 = vector.extract_strided_slice %31 {offsets = [0, 0], sizes = [8, 32], strides = [1, 1]} : vector<16x32xf32> to vector<8x32xf32>
    %35 = vector.extract_strided_slice %32 {offsets = [0, 0], sizes = [8, 32], strides = [1, 1]} : vector<16x32xf32> to vector<8x32xf32>
    %c0_14 = arith.constant 0 : index
    %c0_15 = arith.constant 0 : index
    %c0_16 = arith.constant 0 : index
    %36 = vector.load %arg1[%c0_14, %c0_15, %c0_16] : memref<2x1x8xf32, #tpu.memory_space<vmem>>, vector<1x1x8xf32>
    %37 = vector.shape_cast %36 : vector<1x1x8xf32> to vector<1x8xf32>
    %cst_17 = arith.constant 0.000000e+00 : f32
    %38 = vector.broadcast %cst_17 : f32 to vector<8x32xf32>
    %39 = vector.extract_strided_slice %33 {offsets = [0, 0], sizes = [8, 8], strides = [1, 1]} : vector<8x32xf32> to vector<8x8xf32>
    %40 = vector.extract_strided_slice %34 {offsets = [0, 0], sizes = [8, 8], strides = [1, 1]} : vector<8x32xf32> to vector<8x8xf32>
    %41 = vector.extract_strided_slice %35 {offsets = [0, 0], sizes = [8, 8], strides = [1, 1]} : vector<8x32xf32> to vector<8x8xf32>
    %42 = tpu.transpose %40, [1, 0] : vector<8x8xf32> -> vector<8x8xf32>
    %cst_18 = arith.constant dense<0.000000e+00> : vector<8x8xf32>
    %43 = tpu.matmul %39, %42, %cst_18 {dimension_numbers = #tpu.dot_dimension_numbers<[1], [0], [0], [1], [0, 0, 1, 1], [], []>} : vector<8x8xf32>, vector<8x8xf32>, vector<8x8xf32> -> vector<8x8xf32>
    %44 = vector.broadcast %37 : vector<1x8xf32> to vector<8x8xf32>
    %45 = arith.addf %43, %44 : vector<8x8xf32>
    %cst_19 = arith.constant dense<0xFF800000> : vector<8xf32>
    %46 = vector.multi_reduction <maximumf>, %45, %cst_19 [1] : vector<8x8xf32> to vector<8xf32>
    %47 = vector.shape_cast %46 : vector<8xf32> to vector<8x1xf32>
    %48 = vector.broadcast %47 : vector<8x1xf32> to vector<8x8xf32>
    %49 = arith.subf %45, %48 : vector<8x8xf32>
    %50 = math.exp %49 : vector<8x8xf32>
    %cst_20 = arith.constant dense<0.000000e+00> : vector<8xf32>
    %51 = vector.multi_reduction <add>, %50, %cst_20 [1] : vector<8x8xf32> to vector<8xf32>
    %52 = vector.shape_cast %51 : vector<8xf32> to vector<8x1xf32>
    %53 = tpu.reciprocal %52 : vector<8x1xf32> -> vector<8x1xf32>
    %54 = vector.broadcast %53 : vector<8x1xf32> to vector<8x8xf32>
    %55 = arith.mulf %50, %54 : vector<8x8xf32>
    %cst_21 = arith.constant dense<0.000000e+00> : vector<8x8xf32>
    %56 = tpu.matmul %55, %41, %cst_21 {dimension_numbers = #tpu.dot_dimension_numbers<[1], [0], [0], [1], [0, 0, 1, 1], [], []>} : vector<8x8xf32>, vector<8x8xf32>, vector<8x8xf32> -> vector<8x8xf32>
    %c0_22 = arith.constant 0 : index
    %c0_23 = arith.constant 0 : index
    %c0_24 = arith.constant 0 : index
    %57 = vector.load %arg6[%c0_22, %c0_23, %c0_24] : memref<4x8x32xf32, #tpu.memory_space<vmem>>, vector<1x8x32xf32>
    %58 = vector.shape_cast %57 : vector<1x8x32xf32> to vector<8x32xf32>
    %cst_25 = arith.constant dense<0.000000e+00> : vector<8x32xf32>
    %59 = tpu.matmul %56, %58, %cst_25 {dimension_numbers = #tpu.dot_dimension_numbers<[1], [0], [0], [1], [0, 0, 1, 1], [], []>} : vector<8x8xf32>, vector<8x32xf32>, vector<8x32xf32> -> vector<8x32xf32>
    %60 = arith.addf %38, %59 : vector<8x32xf32>
    %61 = vector.extract_strided_slice %33 {offsets = [0, 8], sizes = [8, 8], strides = [1, 1]} : vector<8x32xf32> to vector<8x8xf32>
    %62 = vector.extract_strided_slice %34 {offsets = [0, 8], sizes = [8, 8], strides = [1, 1]} : vector<8x32xf32> to vector<8x8xf32>
    %63 = vector.extract_strided_slice %35 {offsets = [0, 8], sizes = [8, 8], strides = [1, 1]} : vector<8x32xf32> to vector<8x8xf32>
    %64 = tpu.transpose %62, [1, 0] : vector<8x8xf32> -> vector<8x8xf32>
    %cst_26 = arith.constant dense<0.000000e+00> : vector<8x8xf32>
    %65 = tpu.matmul %61, %64, %cst_26 {dimension_numbers = #tpu.dot_dimension_numbers<[1], [0], [0], [1], [0, 0, 1, 1], [], []>} : vector<8x8xf32>, vector<8x8xf32>, vector<8x8xf32> -> vector<8x8xf32>
    %66 = vector.broadcast %37 : vector<1x8xf32> to vector<8x8xf32>
    %67 = arith.addf %65, %66 : vector<8x8xf32>
    %cst_27 = arith.constant dense<0xFF800000> : vector<8xf32>
    %68 = vector.multi_reduction <maximumf>, %67, %cst_27 [1] : vector<8x8xf32> to vector<8xf32>
    %69 = vector.shape_cast %68 : vector<8xf32> to vector<8x1xf32>
    %70 = vector.broadcast %69 : vector<8x1xf32> to vector<8x8xf32>
    %71 = arith.subf %67, %70 : vector<8x8xf32>
    %72 = math.exp %71 : vector<8x8xf32>
    %cst_28 = arith.constant dense<0.000000e+00> : vector<8xf32>
    %73 = vector.multi_reduction <add>, %72, %cst_28 [1] : vector<8x8xf32> to vector<8xf32>
    %74 = vector.shape_cast %73 : vector<8xf32> to vector<8x1xf32>
    %75 = tpu.reciprocal %74 : vector<8x1xf32> -> vector<8x1xf32>
    %76 = vector.broadcast %75 : vector<8x1xf32> to vector<8x8xf32>
    %77 = arith.mulf %72, %76 : vector<8x8xf32>
    %cst_29 = arith.constant dense<0.000000e+00> : vector<8x8xf32>
    %78 = tpu.matmul %77, %63, %cst_29 {dimension_numbers = #tpu.dot_dimension_numbers<[1], [0], [0], [1], [0, 0, 1, 1], [], []>} : vector<8x8xf32>, vector<8x8xf32>, vector<8x8xf32> -> vector<8x8xf32>
    %c1 = arith.constant 1 : index
    %c0_30 = arith.constant 0 : index
    %c0_31 = arith.constant 0 : index
    %79 = vector.load %arg6[%c1, %c0_30, %c0_31] : memref<4x8x32xf32, #tpu.memory_space<vmem>>, vector<1x8x32xf32>
    %80 = vector.shape_cast %79 : vector<1x8x32xf32> to vector<8x32xf32>
    %cst_32 = arith.constant dense<0.000000e+00> : vector<8x32xf32>
    %81 = tpu.matmul %78, %80, %cst_32 {dimension_numbers = #tpu.dot_dimension_numbers<[1], [0], [0], [1], [0, 0, 1, 1], [], []>} : vector<8x8xf32>, vector<8x32xf32>, vector<8x32xf32> -> vector<8x32xf32>
    %82 = arith.addf %60, %81 : vector<8x32xf32>
    %83 = vector.extract_strided_slice %33 {offsets = [0, 16], sizes = [8, 8], strides = [1, 1]} : vector<8x32xf32> to vector<8x8xf32>
    %84 = vector.extract_strided_slice %34 {offsets = [0, 16], sizes = [8, 8], strides = [1, 1]} : vector<8x32xf32> to vector<8x8xf32>
    %85 = vector.extract_strided_slice %35 {offsets = [0, 16], sizes = [8, 8], strides = [1, 1]} : vector<8x32xf32> to vector<8x8xf32>
    %86 = tpu.transpose %84, [1, 0] : vector<8x8xf32> -> vector<8x8xf32>
    %cst_33 = arith.constant dense<0.000000e+00> : vector<8x8xf32>
    %87 = tpu.matmul %83, %86, %cst_33 {dimension_numbers = #tpu.dot_dimension_numbers<[1], [0], [0], [1], [0, 0, 1, 1], [], []>} : vector<8x8xf32>, vector<8x8xf32>, vector<8x8xf32> -> vector<8x8xf32>
    %88 = vector.broadcast %37 : vector<1x8xf32> to vector<8x8xf32>
    %89 = arith.addf %87, %88 : vector<8x8xf32>
    %cst_34 = arith.constant dense<0xFF800000> : vector<8xf32>
    %90 = vector.multi_reduction <maximumf>, %89, %cst_34 [1] : vector<8x8xf32> to vector<8xf32>
    %91 = vector.shape_cast %90 : vector<8xf32> to vector<8x1xf32>
    %92 = vector.broadcast %91 : vector<8x1xf32> to vector<8x8xf32>
    %93 = arith.subf %89, %92 : vector<8x8xf32>
    %94 = math.exp %93 : vector<8x8xf32>
    %cst_35 = arith.constant dense<0.000000e+00> : vector<8xf32>
    %95 = vector.multi_reduction <add>, %94, %cst_35 [1] : vector<8x8xf32> to vector<8xf32>
    %96 = vector.shape_cast %95 : vector<8xf32> to vector<8x1xf32>
    %97 = tpu.reciprocal %96 : vector<8x1xf32> -> vector<8x1xf32>
    %98 = vector.broadcast %97 : vector<8x1xf32> to vector<8x8xf32>
    %99 = arith.mulf %94, %98 : vector<8x8xf32>
    %cst_36 = arith.constant dense<0.000000e+00> : vector<8x8xf32>
    %100 = tpu.matmul %99, %85, %cst_36 {dimension_numbers = #tpu.dot_dimension_numbers<[1], [0], [0], [1], [0, 0, 1, 1], [], []>} : vector<8x8xf32>, vector<8x8xf32>, vector<8x8xf32> -> vector<8x8xf32>
    %c2 = arith.constant 2 : index
    %c0_37 = arith.constant 0 : index
    %c0_38 = arith.constant 0 : index
    %101 = vector.load %arg6[%c2, %c0_37, %c0_38] : memref<4x8x32xf32, #tpu.memory_space<vmem>>, vector<1x8x32xf32>
    %102 = vector.shape_cast %101 : vector<1x8x32xf32> to vector<8x32xf32>
    %cst_39 = arith.constant dense<0.000000e+00> : vector<8x32xf32>
    %103 = tpu.matmul %100, %102, %cst_39 {dimension_numbers = #tpu.dot_dimension_numbers<[1], [0], [0], [1], [0, 0, 1, 1], [], []>} : vector<8x8xf32>, vector<8x32xf32>, vector<8x32xf32> -> vector<8x32xf32>
    %104 = arith.addf %82, %103 : vector<8x32xf32>
    %105 = vector.extract_strided_slice %33 {offsets = [0, 24], sizes = [8, 8], strides = [1, 1]} : vector<8x32xf32> to vector<8x8xf32>
    %106 = vector.extract_strided_slice %34 {offsets = [0, 24], sizes = [8, 8], strides = [1, 1]} : vector<8x32xf32> to vector<8x8xf32>
    %107 = vector.extract_strided_slice %35 {offsets = [0, 24], sizes = [8, 8], strides = [1, 1]} : vector<8x32xf32> to vector<8x8xf32>
    %108 = tpu.transpose %106, [1, 0] : vector<8x8xf32> -> vector<8x8xf32>
    %cst_40 = arith.constant dense<0.000000e+00> : vector<8x8xf32>
    %109 = tpu.matmul %105, %108, %cst_40 {dimension_numbers = #tpu.dot_dimension_numbers<[1], [0], [0], [1], [0, 0, 1, 1], [], []>} : vector<8x8xf32>, vector<8x8xf32>, vector<8x8xf32> -> vector<8x8xf32>
    %110 = vector.broadcast %37 : vector<1x8xf32> to vector<8x8xf32>
    %111 = arith.addf %109, %110 : vector<8x8xf32>
    %cst_41 = arith.constant dense<0xFF800000> : vector<8xf32>
    %112 = vector.multi_reduction <maximumf>, %111, %cst_41 [1] : vector<8x8xf32> to vector<8xf32>
    %113 = vector.shape_cast %112 : vector<8xf32> to vector<8x1xf32>
    %114 = vector.broadcast %113 : vector<8x1xf32> to vector<8x8xf32>
    %115 = arith.subf %111, %114 : vector<8x8xf32>
    %116 = math.exp %115 : vector<8x8xf32>
    %cst_42 = arith.constant dense<0.000000e+00> : vector<8xf32>
    %117 = vector.multi_reduction <add>, %116, %cst_42 [1] : vector<8x8xf32> to vector<8xf32>
    %118 = vector.shape_cast %117 : vector<8xf32> to vector<8x1xf32>
    %119 = tpu.reciprocal %118 : vector<8x1xf32> -> vector<8x1xf32>
    %120 = vector.broadcast %119 : vector<8x1xf32> to vector<8x8xf32>
    %121 = arith.mulf %116, %120 : vector<8x8xf32>
    %cst_43 = arith.constant dense<0.000000e+00> : vector<8x8xf32>
    %122 = tpu.matmul %121, %107, %cst_43 {dimension_numbers = #tpu.dot_dimension_numbers<[1], [0], [0], [1], [0, 0, 1, 1], [], []>} : vector<8x8xf32>, vector<8x8xf32>, vector<8x8xf32> -> vector<8x8xf32>
    %c3 = arith.constant 3 : index
    %c0_44 = arith.constant 0 : index
    %c0_45 = arith.constant 0 : index
    %123 = vector.load %arg6[%c3, %c0_44, %c0_45] : memref<4x8x32xf32, #tpu.memory_space<vmem>>, vector<1x8x32xf32>
    %124 = vector.shape_cast %123 : vector<1x8x32xf32> to vector<8x32xf32>
    %cst_46 = arith.constant dense<0.000000e+00> : vector<8x32xf32>
    %125 = tpu.matmul %122, %124, %cst_46 {dimension_numbers = #tpu.dot_dimension_numbers<[1], [0], [0], [1], [0, 0, 1, 1], [], []>} : vector<8x8xf32>, vector<8x32xf32>, vector<8x32xf32> -> vector<8x32xf32>
    %126 = arith.addf %104, %125 : vector<8x32xf32>
    %127 = vector.extract_strided_slice %30 {offsets = [8, 0], sizes = [8, 32], strides = [1, 1]} : vector<16x32xf32> to vector<8x32xf32>
    %128 = vector.extract_strided_slice %31 {offsets = [8, 0], sizes = [8, 32], strides = [1, 1]} : vector<16x32xf32> to vector<8x32xf32>
    %129 = vector.extract_strided_slice %32 {offsets = [8, 0], sizes = [8, 32], strides = [1, 1]} : vector<16x32xf32> to vector<8x32xf32>
    %c1_47 = arith.constant 1 : index
    %c0_48 = arith.constant 0 : index
    %c0_49 = arith.constant 0 : index
    %130 = vector.load %arg1[%c1_47, %c0_48, %c0_49] : memref<2x1x8xf32, #tpu.memory_space<vmem>>, vector<1x1x8xf32>
    %131 = vector.shape_cast %130 : vector<1x1x8xf32> to vector<1x8xf32>
    %cst_50 = arith.constant 0.000000e+00 : f32
    %132 = vector.broadcast %cst_50 : f32 to vector<8x32xf32>
    %133 = vector.extract_strided_slice %127 {offsets = [0, 0], sizes = [8, 8], strides = [1, 1]} : vector<8x32xf32> to vector<8x8xf32>
    %134 = vector.extract_strided_slice %128 {offsets = [0, 0], sizes = [8, 8], strides = [1, 1]} : vector<8x32xf32> to vector<8x8xf32>
    %135 = vector.extract_strided_slice %129 {offsets = [0, 0], sizes = [8, 8], strides = [1, 1]} : vector<8x32xf32> to vector<8x8xf32>
    %136 = tpu.transpose %134, [1, 0] : vector<8x8xf32> -> vector<8x8xf32>
    %cst_51 = arith.constant dense<0.000000e+00> : vector<8x8xf32>
    %137 = tpu.matmul %133, %136, %cst_51 {dimension_numbers = #tpu.dot_dimension_numbers<[1], [0], [0], [1], [0, 0, 1, 1], [], []>} : vector<8x8xf32>, vector<8x8xf32>, vector<8x8xf32> -> vector<8x8xf32>
    %138 = vector.broadcast %131 : vector<1x8xf32> to vector<8x8xf32>
    %139 = arith.addf %137, %138 : vector<8x8xf32>
    %cst_52 = arith.constant dense<0xFF800000> : vector<8xf32>
    %140 = vector.multi_reduction <maximumf>, %139, %cst_52 [1] : vector<8x8xf32> to vector<8xf32>
    %141 = vector.shape_cast %140 : vector<8xf32> to vector<8x1xf32>
    %142 = vector.broadcast %141 : vector<8x1xf32> to vector<8x8xf32>
    %143 = arith.subf %139, %142 : vector<8x8xf32>
    %144 = math.exp %143 : vector<8x8xf32>
    %cst_53 = arith.constant dense<0.000000e+00> : vector<8xf32>
    %145 = vector.multi_reduction <add>, %144, %cst_53 [1] : vector<8x8xf32> to vector<8xf32>
    %146 = vector.shape_cast %145 : vector<8xf32> to vector<8x1xf32>
    %147 = tpu.reciprocal %146 : vector<8x1xf32> -> vector<8x1xf32>
    %148 = vector.broadcast %147 : vector<8x1xf32> to vector<8x8xf32>
    %149 = arith.mulf %144, %148 : vector<8x8xf32>
    %cst_54 = arith.constant dense<0.000000e+00> : vector<8x8xf32>
    %150 = tpu.matmul %149, %135, %cst_54 {dimension_numbers = #tpu.dot_dimension_numbers<[1], [0], [0], [1], [0, 0, 1, 1], [], []>} : vector<8x8xf32>, vector<8x8xf32>, vector<8x8xf32> -> vector<8x8xf32>
    %c0_55 = arith.constant 0 : index
    %c0_56 = arith.constant 0 : index
    %c0_57 = arith.constant 0 : index
    %151 = vector.load %arg6[%c0_55, %c0_56, %c0_57] : memref<4x8x32xf32, #tpu.memory_space<vmem>>, vector<1x8x32xf32>
    %152 = vector.shape_cast %151 : vector<1x8x32xf32> to vector<8x32xf32>
    %cst_58 = arith.constant dense<0.000000e+00> : vector<8x32xf32>
    %153 = tpu.matmul %150, %152, %cst_58 {dimension_numbers = #tpu.dot_dimension_numbers<[1], [0], [0], [1], [0, 0, 1, 1], [], []>} : vector<8x8xf32>, vector<8x32xf32>, vector<8x32xf32> -> vector<8x32xf32>
    %154 = arith.addf %132, %153 : vector<8x32xf32>
    %155 = vector.extract_strided_slice %127 {offsets = [0, 8], sizes = [8, 8], strides = [1, 1]} : vector<8x32xf32> to vector<8x8xf32>
    %156 = vector.extract_strided_slice %128 {offsets = [0, 8], sizes = [8, 8], strides = [1, 1]} : vector<8x32xf32> to vector<8x8xf32>
    %157 = vector.extract_strided_slice %129 {offsets = [0, 8], sizes = [8, 8], strides = [1, 1]} : vector<8x32xf32> to vector<8x8xf32>
    %158 = tpu.transpose %156, [1, 0] : vector<8x8xf32> -> vector<8x8xf32>
    %cst_59 = arith.constant dense<0.000000e+00> : vector<8x8xf32>
    %159 = tpu.matmul %155, %158, %cst_59 {dimension_numbers = #tpu.dot_dimension_numbers<[1], [0], [0], [1], [0, 0, 1, 1], [], []>} : vector<8x8xf32>, vector<8x8xf32>, vector<8x8xf32> -> vector<8x8xf32>
    %160 = vector.broadcast %131 : vector<1x8xf32> to vector<8x8xf32>
    %161 = arith.addf %159, %160 : vector<8x8xf32>
    %cst_60 = arith.constant dense<0xFF800000> : vector<8xf32>
    %162 = vector.multi_reduction <maximumf>, %161, %cst_60 [1] : vector<8x8xf32> to vector<8xf32>
    %163 = vector.shape_cast %162 : vector<8xf32> to vector<8x1xf32>
    %164 = vector.broadcast %163 : vector<8x1xf32> to vector<8x8xf32>
    %165 = arith.subf %161, %164 : vector<8x8xf32>
    %166 = math.exp %165 : vector<8x8xf32>
    %cst_61 = arith.constant dense<0.000000e+00> : vector<8xf32>
    %167 = vector.multi_reduction <add>, %166, %cst_61 [1] : vector<8x8xf32> to vector<8xf32>
    %168 = vector.shape_cast %167 : vector<8xf32> to vector<8x1xf32>
    %169 = tpu.reciprocal %168 : vector<8x1xf32> -> vector<8x1xf32>
    %170 = vector.broadcast %169 : vector<8x1xf32> to vector<8x8xf32>
    %171 = arith.mulf %166, %170 : vector<8x8xf32>
    %cst_62 = arith.constant dense<0.000000e+00> : vector<8x8xf32>
    %172 = tpu.matmul %171, %157, %cst_62 {dimension_numbers = #tpu.dot_dimension_numbers<[1], [0], [0], [1], [0, 0, 1, 1], [], []>} : vector<8x8xf32>, vector<8x8xf32>, vector<8x8xf32> -> vector<8x8xf32>
    %c1_63 = arith.constant 1 : index
    %c0_64 = arith.constant 0 : index
    %c0_65 = arith.constant 0 : index
    %173 = vector.load %arg6[%c1_63, %c0_64, %c0_65] : memref<4x8x32xf32, #tpu.memory_space<vmem>>, vector<1x8x32xf32>
    %174 = vector.shape_cast %173 : vector<1x8x32xf32> to vector<8x32xf32>
    %cst_66 = arith.constant dense<0.000000e+00> : vector<8x32xf32>
    %175 = tpu.matmul %172, %174, %cst_66 {dimension_numbers = #tpu.dot_dimension_numbers<[1], [0], [0], [1], [0, 0, 1, 1], [], []>} : vector<8x8xf32>, vector<8x32xf32>, vector<8x32xf32> -> vector<8x32xf32>
    %176 = arith.addf %154, %175 : vector<8x32xf32>
    %177 = vector.extract_strided_slice %127 {offsets = [0, 16], sizes = [8, 8], strides = [1, 1]} : vector<8x32xf32> to vector<8x8xf32>
    %178 = vector.extract_strided_slice %128 {offsets = [0, 16], sizes = [8, 8], strides = [1, 1]} : vector<8x32xf32> to vector<8x8xf32>
    %179 = vector.extract_strided_slice %129 {offsets = [0, 16], sizes = [8, 8], strides = [1, 1]} : vector<8x32xf32> to vector<8x8xf32>
    %180 = tpu.transpose %178, [1, 0] : vector<8x8xf32> -> vector<8x8xf32>
    %cst_67 = arith.constant dense<0.000000e+00> : vector<8x8xf32>
    %181 = tpu.matmul %177, %180, %cst_67 {dimension_numbers = #tpu.dot_dimension_numbers<[1], [0], [0], [1], [0, 0, 1, 1], [], []>} : vector<8x8xf32>, vector<8x8xf32>, vector<8x8xf32> -> vector<8x8xf32>
    %182 = vector.broadcast %131 : vector<1x8xf32> to vector<8x8xf32>
    %183 = arith.addf %181, %182 : vector<8x8xf32>
    %cst_68 = arith.constant dense<0xFF800000> : vector<8xf32>
    %184 = vector.multi_reduction <maximumf>, %183, %cst_68 [1] : vector<8x8xf32> to vector<8xf32>
    %185 = vector.shape_cast %184 : vector<8xf32> to vector<8x1xf32>
    %186 = vector.broadcast %185 : vector<8x1xf32> to vector<8x8xf32>
    %187 = arith.subf %183, %186 : vector<8x8xf32>
    %188 = math.exp %187 : vector<8x8xf32>
    %cst_69 = arith.constant dense<0.000000e+00> : vector<8xf32>
    %189 = vector.multi_reduction <add>, %188, %cst_69 [1] : vector<8x8xf32> to vector<8xf32>
    %190 = vector.shape_cast %189 : vector<8xf32> to vector<8x1xf32>
    %191 = tpu.reciprocal %190 : vector<8x1xf32> -> vector<8x1xf32>
    %192 = vector.broadcast %191 : vector<8x1xf32> to vector<8x8xf32>
    %193 = arith.mulf %188, %192 : vector<8x8xf32>
    %cst_70 = arith.constant dense<0.000000e+00> : vector<8x8xf32>
    %194 = tpu.matmul %193, %179, %cst_70 {dimension_numbers = #tpu.dot_dimension_numbers<[1], [0], [0], [1], [0, 0, 1, 1], [], []>} : vector<8x8xf32>, vector<8x8xf32>, vector<8x8xf32> -> vector<8x8xf32>
    %c2_71 = arith.constant 2 : index
    %c0_72 = arith.constant 0 : index
    %c0_73 = arith.constant 0 : index
    %195 = vector.load %arg6[%c2_71, %c0_72, %c0_73] : memref<4x8x32xf32, #tpu.memory_space<vmem>>, vector<1x8x32xf32>
    %196 = vector.shape_cast %195 : vector<1x8x32xf32> to vector<8x32xf32>
    %cst_74 = arith.constant dense<0.000000e+00> : vector<8x32xf32>
    %197 = tpu.matmul %194, %196, %cst_74 {dimension_numbers = #tpu.dot_dimension_numbers<[1], [0], [0], [1], [0, 0, 1, 1], [], []>} : vector<8x8xf32>, vector<8x32xf32>, vector<8x32xf32> -> vector<8x32xf32>
    %198 = arith.addf %176, %197 : vector<8x32xf32>
    %199 = vector.extract_strided_slice %127 {offsets = [0, 24], sizes = [8, 8], strides = [1, 1]} : vector<8x32xf32> to vector<8x8xf32>
    %200 = vector.extract_strided_slice %128 {offsets = [0, 24], sizes = [8, 8], strides = [1, 1]} : vector<8x32xf32> to vector<8x8xf32>
    %201 = vector.extract_strided_slice %129 {offsets = [0, 24], sizes = [8, 8], strides = [1, 1]} : vector<8x32xf32> to vector<8x8xf32>
    %202 = tpu.transpose %200, [1, 0] : vector<8x8xf32> -> vector<8x8xf32>
    %cst_75 = arith.constant dense<0.000000e+00> : vector<8x8xf32>
    %203 = tpu.matmul %199, %202, %cst_75 {dimension_numbers = #tpu.dot_dimension_numbers<[1], [0], [0], [1], [0, 0, 1, 1], [], []>} : vector<8x8xf32>, vector<8x8xf32>, vector<8x8xf32> -> vector<8x8xf32>
    %204 = vector.broadcast %131 : vector<1x8xf32> to vector<8x8xf32>
    %205 = arith.addf %203, %204 : vector<8x8xf32>
    %cst_76 = arith.constant dense<0xFF800000> : vector<8xf32>
    %206 = vector.multi_reduction <maximumf>, %205, %cst_76 [1] : vector<8x8xf32> to vector<8xf32>
    %207 = vector.shape_cast %206 : vector<8xf32> to vector<8x1xf32>
    %208 = vector.broadcast %207 : vector<8x1xf32> to vector<8x8xf32>
    %209 = arith.subf %205, %208 : vector<8x8xf32>
    %210 = math.exp %209 : vector<8x8xf32>
    %cst_77 = arith.constant dense<0.000000e+00> : vector<8xf32>
    %211 = vector.multi_reduction <add>, %210, %cst_77 [1] : vector<8x8xf32> to vector<8xf32>
    %212 = vector.shape_cast %211 : vector<8xf32> to vector<8x1xf32>
    %213 = tpu.reciprocal %212 : vector<8x1xf32> -> vector<8x1xf32>
    %214 = vector.broadcast %213 : vector<8x1xf32> to vector<8x8xf32>
    %215 = arith.mulf %210, %214 : vector<8x8xf32>
    %cst_78 = arith.constant dense<0.000000e+00> : vector<8x8xf32>
    %216 = tpu.matmul %215, %201, %cst_78 {dimension_numbers = #tpu.dot_dimension_numbers<[1], [0], [0], [1], [0, 0, 1, 1], [], []>} : vector<8x8xf32>, vector<8x8xf32>, vector<8x8xf32> -> vector<8x8xf32>
    %c3_79 = arith.constant 3 : index
    %c0_80 = arith.constant 0 : index
    %c0_81 = arith.constant 0 : index
    %217 = vector.load %arg6[%c3_79, %c0_80, %c0_81] : memref<4x8x32xf32, #tpu.memory_space<vmem>>, vector<1x8x32xf32>
    %218 = vector.shape_cast %217 : vector<1x8x32xf32> to vector<8x32xf32>
    %cst_82 = arith.constant dense<0.000000e+00> : vector<8x32xf32>
    %219 = tpu.matmul %216, %218, %cst_82 {dimension_numbers = #tpu.dot_dimension_numbers<[1], [0], [0], [1], [0, 0, 1, 1], [], []>} : vector<8x8xf32>, vector<8x32xf32>, vector<8x32xf32> -> vector<8x32xf32>
    %220 = arith.addf %198, %219 : vector<8x32xf32>
    %221 = tpu.concatenate %126, %220 in 0 : vector<8x32xf32>, vector<8x32xf32> -> vector<16x32xf32>
    %c0_83 = arith.constant 0 : index
    %c0_84 = arith.constant 0 : index
    %222 = vector.load %arg7[%c0_83, %c0_84] : memref<1x32xf32, #tpu.memory_space<vmem>>, vector<1x32xf32>
    %223 = vector.broadcast %222 : vector<1x32xf32> to vector<16x32xf32>
    %224 = arith.addf %221, %223 : vector<16x32xf32>
    %225 = arith.addf %0, %224 : vector<16x32xf32>
    %c0_85 = arith.constant 0 : index
    %c0_86 = arith.constant 0 : index
    %226 = vector.load %arg8[%c0_85, %c0_86] : memref<1x32xf32, #tpu.memory_space<vmem>>, vector<1x32xf32>
    %c0_87 = arith.constant 0 : index
    %c0_88 = arith.constant 0 : index
    %227 = vector.load %arg9[%c0_87, %c0_88] : memref<1x32xf32, #tpu.memory_space<vmem>>, vector<1x32xf32>
    %cst_89 = arith.constant dense<0.000000e+00> : vector<16xf32>
    %228 = vector.multi_reduction <add>, %225, %cst_89 [1] : vector<16x32xf32> to vector<16xf32>
    %229 = vector.shape_cast %228 : vector<16xf32> to vector<16x1xf32>
    %cst_90 = arith.constant 3.200000e+01 : f32
    %230 = vector.broadcast %cst_90 : f32 to vector<16x1xf32>
    %231 = arith.divf %229, %230 : vector<16x1xf32>
    %232 = vector.broadcast %231 : vector<16x1xf32> to vector<16x32xf32>
    %233 = arith.subf %225, %232 : vector<16x32xf32>
    %234 = arith.mulf %233, %233 : vector<16x32xf32>
    %cst_91 = arith.constant dense<0.000000e+00> : vector<16xf32>
    %235 = vector.multi_reduction <add>, %234, %cst_91 [1] : vector<16x32xf32> to vector<16xf32>
    %236 = vector.shape_cast %235 : vector<16xf32> to vector<16x1xf32>
    %cst_92 = arith.constant 0.0322580636 : f32
    %237 = vector.broadcast %cst_92 : f32 to vector<16x1xf32>
    %238 = arith.mulf %236, %237 : vector<16x1xf32>
    %239 = math.sqrt %238 : vector<16x1xf32>
    %240 = vector.broadcast %231 : vector<16x1xf32> to vector<16x32xf32>
    %241 = arith.subf %225, %240 : vector<16x32xf32>
    %242 = vector.broadcast %226 : vector<1x32xf32> to vector<16x32xf32>
    %243 = arith.mulf %242, %241 : vector<16x32xf32>
    %cst_93 = arith.constant 9.99999997E-7 : f32
    %244 = vector.broadcast %cst_93 : f32 to vector<16x1xf32>
    %245 = arith.addf %239, %244 : vector<16x1xf32>
    %246 = vector.broadcast %245 : vector<16x1xf32> to vector<16x32xf32>
    %247 = arith.divf %243, %246 : vector<16x32xf32>
    %248 = vector.broadcast %227 : vector<1x32xf32> to vector<16x32xf32>
    %249 = arith.addf %247, %248 : vector<16x32xf32>
    %c0_94 = arith.constant 0 : index
    %c0_95 = arith.constant 0 : index
    %250 = vector.load %arg10[%c0_94, %c0_95] : memref<32x64xf32, #tpu.memory_space<vmem>>, vector<32x64xf32>
    %cst_96 = arith.constant dense<0.000000e+00> : vector<16x64xf32>
    %251 = tpu.matmul %249, %250, %cst_96 {dimension_numbers = #tpu.dot_dimension_numbers<[1], [0], [0], [1], [0, 0, 1, 1], [], []>} : vector<16x32xf32>, vector<32x64xf32>, vector<16x64xf32> -> vector<16x64xf32>
    %c0_97 = arith.constant 0 : index
    %c0_98 = arith.constant 0 : index
    %252 = vector.load %arg11[%c0_97, %c0_98] : memref<1x64xf32, #tpu.memory_space<vmem>>, vector<1x64xf32>
    %253 = vector.broadcast %252 : vector<1x64xf32> to vector<16x64xf32>
    %254 = arith.addf %251, %253 : vector<16x64xf32>
    %cst_99 = arith.constant 0.000000e+00 : f32
    %255 = vector.broadcast %cst_99 : f32 to vector<16x64xf32>
    %256 = arith.maximumf %254, %255 : vector<16x64xf32>
    %c0_100 = arith.constant 0 : index
    %c0_101 = arith.constant 0 : index
    %257 = vector.load %arg12[%c0_100, %c0_101] : memref<64x32xf32, #tpu.memory_space<vmem>>, vector<64x32xf32>
    %cst_102 = arith.constant dense<0.000000e+00> : vector<16x32xf32>
    %258 = tpu.matmul %256, %257, %cst_102 {dimension_numbers = #tpu.dot_dimension_numbers<[1], [0], [0], [1], [0, 0, 1, 1], [], []>} : vector<16x64xf32>, vector<64x32xf32>, vector<16x32xf32> -> vector<16x32xf32>
    %c0_103 = arith.constant 0 : index
    %c0_104 = arith.constant 0 : index
    %259 = vector.load %arg13[%c0_103, %c0_104] : memref<1x32xf32, #tpu.memory_space<vmem>>, vector<1x32xf32>
    %260 = vector.broadcast %259 : vector<1x32xf32> to vector<16x32xf32>
    %261 = arith.addf %258, %260 : vector<16x32xf32>
    %262 = arith.addf %225, %261 : vector<16x32xf32>
    %c0_105 = arith.constant 0 : index
    %c0_106 = arith.constant 0 : index
    %263 = vector.load %arg14[%c0_105, %c0_106] : memref<16x32xf32, #tpu.memory_space<vmem>>, vector<16x32xf32>
    tpu.vector_store %arg14[%c0_105, %c0_106], %262 {strides = array<i32>} : memref<16x32xf32, #tpu.memory_space<vmem>>, vector<16x32xf32>,
    return
  }
}

</mosaic_0001>

<llo_original>
// kernel: tpu_custom_call.1
$region0: #{tpu_custom_call.1}
  #allocation0 [shape = 'u32[]', space=smem, size = 0x4, offset = 0x4, fixed_abs, tag = 'smem constant byte address 0x4 - core index']
  #allocation1 [shape = 'u32[144,128]{1,0:T(1,128)}', space=vmem, size = 0x12000, scoped, tag = 'internal scratch']
  %s0 = inlined_call_operand.hbm [shape: f32[16,32], index: 0, kind: input, shape index: {}]
  %s1 = inlined_call_operand.vmem [shape: f32[2,1,8], index: 1, kind: input, shape index: {}]
  %s2 = inlined_call_operand.vmem [shape: f32[1,32], index: 2, kind: input, shape index: {}]
  %s3 = inlined_call_operand.vmem [shape: f32[1,32], index: 3, kind: input, shape index: {}]
  %s4 = inlined_call_operand.vmem [shape: f32[32,96], index: 4, kind: input, shape index: {}]
  %s5 = inlined_call_operand.vmem [shape: f32[1,96], index: 5, kind: input, shape index: {}]
  %s6 = inlined_call_operand.vmem [shape: f32[4,8,32], index: 6, kind: input, shape index: {}]
  %s7 = inlined_call_operand.vmem [shape: f32[1,32], index: 7, kind: input, shape index: {}]
  %s8 = inlined_call_operand.vmem [shape: f32[1,32], index: 8, kind: input, shape index: {}]
  %s9 = inlined_call_operand.vmem [shape: f32[1,32], index: 9, kind: input, shape index: {}]
  %s10 = inlined_call_operand.vmem [shape: f32[32,64], index: 10, kind: input, shape index: {}]
  %s11 = inlined_call_operand.vmem [shape: f32[1,64], index: 11, kind: input, shape index: {}]
  %s12 = inlined_call_operand.vmem [shape: f32[64,32], index: 12, kind: input, shape index: {}]
  %s13 = inlined_call_operand.vmem [shape: f32[1,32], index: 13, kind: input, shape index: {}]
  %s14 = inlined_call_operand.hbm [shape: f32[16,32], index: 14, kind: output, shape index: {}]
  %s15 = sld [smem:[#allocation0]]
  $region70: #{tpu_custom_call.1} parent=0
    _
  %s17 = ssub.s32 1, %s15
  %s18 = scalar_select 0, %s17, %s15
  $region1: #{tpu_custom_call.1} parent=0
    #allocation2 [shape = 'u8[8192]{0}', space=vmem, size = 0x2000, scoped, tag = 'input window, operand 0, single buffered']
    #allocation3 [shape = 's32[1]{0}', space=sflag, size = 0x4, scoped, tag = 'scoped memory for tpu_custom_call.1']
    #allocation4 [shape = 's32[1]{0}', space=sflag, size = 0x4, scoped, tag = 'scoped memory for tpu_custom_call.1']
    #allocation5 [shape = 'u8[8192]{0}', space=vmem, size = 0x2000, scoped, tag = 'output window, operand 0, single buffered']
    %19 = vsyncpa [#allocation3], 0
    %20 = vsyncpa [#allocation4], 0
    // Predicated region
    $region2: #{tpu_custom_call.1} parent=1 // pred_check
      _
    $region3: #{tpu_custom_call.1} parent=1 // pred_check_branch
      %22 = sbr.rel (0) target = $region5
    $region4: #{tpu_custom_call.1} parent=1 // pred_region
      %s24 = ssub.s32 256, 256
      %25 = vsyncadd [#allocation3], %s24
      %s26 = sshll.u32 [#allocation2], 4
      %s27 = int_to_ptr.vmem [resolvable:$true] %s26
      %32 = dma.hbm_to_vmem [thread:$0]  %s0, 256, %s27, [#allocation3], 128, 128, 8
    $region5: #{tpu_custom_call.1} parent=1 // pred_fallthru
      _
    // Predicated region
    $region6: #{tpu_custom_call.1} parent=1 // pred_check
      _
    $region7: #{tpu_custom_call.1} parent=1 // pred_check_branch
      %34 = sbr.rel (0) target = $region9
    $region8: #{tpu_custom_call.1} parent=1 // pred_region
      _
    $region9: #{tpu_custom_call.1} parent=1 // pred_fallthru
      _
    // Predicated region
    $region10: #{tpu_custom_call.1} parent=1 // pred_check
      _
    $region11: #{tpu_custom_call.1} parent=1 // pred_check_branch
      %36 = sbr.rel (0) target = $region13
    $region12: #{tpu_custom_call.1} parent=1 // pred_region
      _
    $region13: #{tpu_custom_call.1} parent=1 // pred_fallthru
      _
    // Predicated region
    $region14: #{tpu_custom_call.1} parent=1 // pred_check
      _
    $region15: #{tpu_custom_call.1} parent=1 // pred_check_branch
      %38 = sbr.rel (0) target = $region17
    $region16: #{tpu_custom_call.1} parent=1 // pred_region
      _
    $region17: #{tpu_custom_call.1} parent=1 // pred_fallthru
      _
    // Predicated region
    $region18: #{tpu_custom_call.1} parent=1 // pred_check
      _
    $region19: #{tpu_custom_call.1} parent=1 // pred_check_branch
      %40 = sbr.rel (0) target = $region21
    $region20: #{tpu_custom_call.1} parent=1 // pred_region
      _
    $region21: #{tpu_custom_call.1} parent=1 // pred_fallthru
      _
    // Predicated region
    $region22: #{tpu_custom_call.1} parent=1 // pred_check
      _
    $region23: #{tpu_custom_call.1} parent=1 // pred_check_branch
      %42 = sbr.rel (0) target = $region25
    $region24: #{tpu_custom_call.1} parent=1 // pred_region
      _
    $region25: #{tpu_custom_call.1} parent=1 // pred_fallthru
      _
    // Predicated region
    $region26: #{tpu_custom_call.1} parent=1 // pred_check
      _
    $region27: #{tpu_custom_call.1} parent=1 // pred_check_branch
      %44 = sbr.rel (0) target = $region29
    $region28: #{tpu_custom_call.1} parent=1 // pred_region
      _
    $region29: #{tpu_custom_call.1} parent=1 // pred_fallthru
      _
    // Predicated region
    $region30: #{tpu_custom_call.1} parent=1 // pred_check
      _
    $region31: #{tpu_custom_call.1} parent=1 // pred_check_branch
      %46 = sbr.rel (0) target = $region33
    $region32: #{tpu_custom_call.1} parent=1 // pred_region
      _
    $region33: #{tpu_custom_call.1} parent=1 // pred_fallthru
      _
    // Predicated region
    $region34: #{tpu_custom_call.1} parent=1 // pred_check
      _
    $region35: #{tpu_custom_call.1} parent=1 // pred_check_branch
      %48 = sbr.rel (0) target = $region37
    $region36: #{tpu_custom_call.1} parent=1 // pred_region
      _
    $region37: #{tpu_custom_call.1} parent=1 // pred_fallthru
      _
    // Predicated region
    $region38: #{tpu_custom_call.1} parent=1 // pred_check
      _
    $region39: #{tpu_custom_call.1} parent=1 // pred_check_branch
      %50 = sbr.rel (0) target = $region41
    $region40: #{tpu_custom_call.1} parent=1 // pred_region
      _
    $region41: #{tpu_custom_call.1} parent=1 // pred_fallthru
      _
    // Predicated region
    $region42: #{tpu_custom_call.1} parent=1 // pred_check
      _
    $region43: #{tpu_custom_call.1} parent=1 // pred_check_branch
      %52 = sbr.rel (0) target = $region45
    $region44: #{tpu_custom_call.1} parent=1 // pred_region
      _
    $region45: #{tpu_custom_call.1} parent=1 // pred_fallthru
      _
    // Predicated region
    $region46: #{tpu_custom_call.1} parent=1 // pred_check
      _
    $region47: #{tpu_custom_call.1} parent=1 // pred_check_branch
      %54 = sbr.rel (0) target = $region49
    $region48: #{tpu_custom_call.1} parent=1 // pred_region
      _
    $region49: #{tpu_custom_call.1} parent=1 // pred_fallthru
      _
    // Predicated region
    $region50: #{tpu_custom_call.1} parent=1 // pred_check
      _
    $region51: #{tpu_custom_call.1} parent=1 // pred_check_branch
      %56 = sbr.rel (0) target = $region53
    $region52: #{tpu_custom_call.1} parent=1 // pred_region
      _
    $region53: #{tpu_custom_call.1} parent=1 // pred_fallthru
      _
    // Predicated region
    $region54: #{tpu_custom_call.1} parent=1 // pred_check
      _
    $region55: #{tpu_custom_call.1} parent=1 // pred_check_branch
      %58 = sbr.rel (0) target = $region57
    $region56: #{tpu_custom_call.1} parent=1 // pred_region
      _
    $region57: #{tpu_custom_call.1} parent=1 // pred_fallthru
      _
    // Predicated region
    $region58: #{tpu_custom_call.1} parent=1 // pred_check
      _
    $region59: #{tpu_custom_call.1} parent=1 // pred_check_branch
      %60 = sbr.rel (0) target = $region61
    $region60: #{tpu_custom_call.1} parent=1 // pred_region
      %61 = dma.done [#allocation3], 256
    $region61: #{tpu_custom_call.1} parent=1 // pred_fallthru
      _
    %v62 = vld [vmem:[#allocation2] sm:$0xff]
    %v63 = vld [vmem:[#allocation2 + $0x8] sm:$0xff]
    %v64 = vld [vmem:[%s2] sm:$0x1]
    %v65 = vld [vmem:[%s3] sm:$0x1]
    %vm66 = vcmask 261120
    %v67 = vsel %vm66, %v62, 0.0
    %68 = vadd.xlane.f32.xlu0 %v67
    %v69 = vpop.xlane.xlu0 %68
    %v70 = vsel %vm66, %v63, 0.0
    %71 = vadd.xlane.f32.xlu0 %v70
    %v72 = vpop.xlane.xlu0 %71
    %v73 = vrcp.pop 32.0
    %v74 = vmul.f32 %v69, %v73
    %v75 = vmul.f32 %v72, %v73
    %v76 = vsub.f32 %v62, %v74
    %v77 = vsub.f32 %v63, %v75
    %v78 = vmul.f32 %v76, %v76
    %v79 = vmul.f32 %v77, %v77
    %v80 = vsel %vm66, %v78, 0.0
    %81 = vadd.xlane.f32.xlu0 %v80
    %v82 = vpop.xlane.xlu0 %81
    %v83 = vsel %vm66, %v79, 0.0
    %84 = vadd.xlane.f32.xlu0 %v83
    %v85 = vpop.xlane.xlu0 %84
    %v86 = vmul.f32 %v82, 0.032258064
    %v87 = vmul.f32 %v85, 0.032258064
    %v88 = vrsqrt.pop %v86
    %v89 = vmul.f32 %v86, %v88
    %vm90 = vcmp.eq.f32.partialorder %v86, inf
    %v91 = vsel %vm90, %v86, %v89
    %vm92 = vcmp.eq.f32.partialorder %v86, 0.0
    %v93 = vand.u32 %v86, 2147483648
    %v94 = vsel %vm92, %v93, %v91
    %v95 = vrsqrt.pop %v87
    %v96 = vmul.f32 %v87, %v95
    %vm97 = vcmp.eq.f32.partialorder %v87, inf
    %v98 = vsel %vm97, %v87, %v96
    %vm99 = vcmp.eq.f32.partialorder %v87, 0.0
    %v100 = vand.u32 %v87, 2147483648
    %v101 = vsel %vm99, %v100, %v98
    %v103 = vlaneseq
    %v104 = vshrl.u32 %v103, 7
    %v105 = vsub.s32 0, %v104
    %v106 = vrot.slane %v64, %v105
    %v108 = vmul.f32 %v106, %v76
    %v109 = vmul.f32 %v106, %v77
    %v110 = vadd.f32 %v94, 1e-06
    %v111 = vadd.f32 %v101, 1e-06
    %v112 = vrcp.pop %v110
    %v113 = vmul.f32 %v108, %v112
    %v114 = vrcp.pop %v111
    %v115 = vmul.f32 %v109, %v114
    %v117 = vlaneseq
    %v118 = vshrl.u32 %v117, 7
    %v119 = vsub.s32 0, %v118
    %v120 = vrot.slane %v65, %v119
    %v122 = vadd.f32 %v113, %v120
    %v123 = vadd.f32 %v115, %v120
    %v124 = vld [vmem:[%s4] sm:$0xff]
    %v125 = vld [vmem:[%s4 + $0x8] sm:$0xff]
    %v126 = vld [vmem:[%s4 + $0x10] sm:$0xff]
    %v127 = vld [vmem:[%s4 + $0x18] sm:$0xff]
    %v128 = vld [vmem:[%s5] sm:$0x1]
    %v130 = vlaneseq
    %v131 = vshrl.u32 %v130, 7
    %v132 = vsub.s32 0, %v131
    %v133 = vrot.slane %v128, %v132
    %v136 = vsel %vm66, %v122, 0
    %v139 = vsel %vm66, %v123, 0
    %141 = vmatprep.subr.mxu0 0.0
    %142 = vmatpush1.msra.mxu0 %v124
    %143 = vmatprep.subr.mxu0 0.0
    %144 = vmatpush1.msra.mxu0 %v125
    %145 = vmatprep.subr.mxu0 0.0
    %146 = vmatpush1.msra.mxu0 %v126
    %147 = vmatprep.subr.mxu0 0.0
    %148 = vmatpush1.msra.mxu0 %v127
    %149 = vmatprep.subr.mxu0 0.0
    %150 = vmatpush1.msra.mxu0 0.0
    %151 = vmatprep.subr.mxu0 0.0
    %152 = vmatpush1.msra.mxu0 0.0
    %153 = vmatprep.subr.mxu0 0.0
    %154 = vmatpush1.msra.mxu0 0.0
    %155 = vmatprep.subr.mxu0 0.0
    %156 = vmatpush1.msra.mxu0 0.0
    %157 = vmatprep.subr.mxu0 0.0
    %158 = vmatpush1.msra.mxu0 0.0
    %159 = vmatprep.subr.mxu0 0.0
    %160 = vmatpush1.msra.mxu0 0.0
    %161 = vmatprep.subr.mxu0 0.0
    %162 = vmatpush1.msra.mxu0 0.0
    %163 = vmatprep.subr.mxu0 0.0
    %164 = vmatpush1.msra.mxu0 0.0
    %165 = vmatprep.subr.mxu0 0.0
    %166 = vmatpush1.msra.mxu0 0.0
    %167 = vmatprep.subr.mxu0 0.0
    %168 = vmatpush1.msra.mxu0 0.0
    %169 = vmatprep.subr.mxu0 0.0
    %170 = vmatpush1.msra.mxu0 0.0
    %171 = vmatprep.subr.mxu0 0.0
    %172 = vmatpush1.msra.mxu0 0.0
    %173 = vmatprep.subr.mxu0 0.0
    %174 = vmatpush1.msra.mxu0 0.0
    %175 = vmatprep.subr.mxu0 0.0
    %176 = vmatpush1.msra.mxu0 0.0
    %177 = vmatprep.subr.mxu0 0.0
    %178 = vmatpush1.msra.mxu0 0.0
    %179 = vmatprep.subr.mxu0 0.0
    %180 = vmatpush1.msra.mxu0 0.0
    %181 = vmatprep.subr.mxu0 0.0
    %182 = vmatpush1.msra.mxu0 0.0
    %183 = vmatprep.subr.mxu0 0.0
    %184 = vmatpush1.msra.mxu0 0.0
    %185 = vmatprep.subr.mxu0 0.0
    %186 = vmatpush1.msra.mxu0 0.0
    %187 = vmatprep.subr.mxu0 0.0
    %188 = vmatpush1.msra.mxu0 0.0
    %189 = vmatprep.subr.mxu0 0.0
    %190 = vmatpush1.msra.mxu0 0.0
    %191 = vmatprep.subr.mxu0 0.0
    %192 = vmatpush1.msra.mxu0 0.0
    %193 = vmatprep.subr.mxu0 0.0
    %194 = vmatpush1.msra.mxu0 0.0
    %195 = vmatprep.subr.mxu0 0.0
    %196 = vmatpush1.msra.mxu0 0.0
    %197 = vmatprep.subr.mxu0 0.0
    %198 = vmatpush1.msra.mxu0 0.0
    %199 = vmatprep.subr.mxu0 0.0
    %200 = vmatpush1.msra.mxu0 0.0
    %201 = vmatprep.subr.mxu0 0.0
    %202 = vmatpush1.msra.mxu0 0.0
    %203 = vmatprep.subr.mxu0 0.0
    %204 = vmatpush1.msra.mxu0 0.0
    %205 = vmatprep.mubr.f32.mxu0 0.0
    %206 = vmatmul.mubr.f32.gmra.mrb[0].mxu0 %v136
    %v207 = vpop.f32.mrb[0].mxu0
    %v208 = vadd.f32 %v133, %v207
    %v209 = vpop.f32.mrb[0].mxu0
    %210 = vmatprep.mubr.f32.mxu0 0.0
    %211 = vmatmul.mubr.f32.gmra.mrb[0].mxu0 %v139
    %v212 = vpop.f32.mrb[0].mxu0
    %v213 = vadd.f32 %v133, %v212
    %v214 = vpop.f32.mrb[0].mxu0
    %215 = vdwg.mxu0
    %v216 = vld [vmem:[%s1] sm:$0x1]
    %v218 = vlaneseq
    %v219 = vshrl.u32 %v218, 7
    %v220 = vsub.s32 0, %v219
    %v221 = vrot.slane %v216, %v220
    %224 = vrot.lane.b32.xlu0 %v208, 96
    %v225 = vpop.permute.xlu0 %224
    %vm226 = vcmask 64512
    %v227 = vsel %vm226, %v208, 0
    %v229 = vsel %vm226, %v225, 0
    %231 = vmatprep.subr.mxu0 0.0
    %232 = vmatpush1.xpose.msra.mxu0 %v229
    %233 = vmatprep.subr.mxu0 0.0
    %234 = vmatpush1.xpose.msra.mxu0 0.0
    %235 = vmatprep.subr.mxu0 0.0
    %236 = vmatpush1.xpose.msra.mxu0 0.0
    %237 = vmatprep.subr.mxu0 0.0
    %238 = vmatpush1.xpose.msra.mxu0 0.0
    %239 = vmatprep.subr.mxu0 0.0
    %240 = vmatpush1.xpose.msra.mxu0 0.0
    %241 = vmatprep.subr.mxu0 0.0
    %242 = vmatpush1.xpose.msra.mxu0 0.0
    %243 = vmatprep.subr.mxu0 0.0
    %244 = vmatpush1.xpose.msra.mxu0 0.0
    %245 = vmatprep.subr.mxu0 0.0
    %246 = vmatpush1.xpose.msra.mxu0 0.0
    %247 = vmatprep.subr.mxu0 0.0
    %248 = vmatpush1.xpose.msra.mxu0 0.0
    %249 = vmatprep.subr.mxu0 0.0
    %250 = vmatpush1.xpose.msra.mxu0 0.0
    %251 = vmatprep.subr.mxu0 0.0
    %252 = vmatpush1.xpose.msra.mxu0 0.0
    %253 = vmatprep.subr.mxu0 0.0
    %254 = vmatpush1.xpose.msra.mxu0 0.0
    %255 = vmatprep.subr.mxu0 0.0
    %256 = vmatpush1.xpose.msra.mxu0 0.0
    %257 = vmatprep.subr.mxu0 0.0
    %258 = vmatpush1.xpose.msra.mxu0 0.0
    %259 = vmatprep.subr.mxu0 0.0
    %260 = vmatpush1.xpose.msra.mxu0 0.0
    %261 = vmatprep.subr.mxu0 0.0
    %262 = vmatpush1.xpose.msra.mxu0 0.0
    %263 = vmatprep.subr.mxu0 0.0
    %264 = vmatpush1.xpose.msra.mxu0 0.0
    %265 = vmatprep.subr.mxu0 0.0
    %266 = vmatpush1.xpose.msra.mxu0 0.0
    %267 = vmatprep.subr.mxu0 0.0
    %268 = vmatpush1.xpose.msra.mxu0 0.0
    %269 = vmatprep.subr.mxu0 0.0
    %270 = vmatpush1.xpose.msra.mxu0 0.0
    %271 = vmatprep.subr.mxu0 0.0
    %272 = vmatpush1.xpose.msra.mxu0 0.0
    %273 = vmatprep.subr.mxu0 0.0
    %274 = vmatpush1.xpose.msra.mxu0 0.0
    %275 = vmatprep.subr.mxu0 0.0
    %276 = vmatpush1.xpose.msra.mxu0 0.0
    %277 = vmatprep.subr.mxu0 0.0
    %278 = vmatpush1.xpose.msra.mxu0 0.0
    %279 = vmatprep.subr.mxu0 0.0
    %280 = vmatpush1.xpose.msra.mxu0 0.0
    %281 = vmatprep.subr.mxu0 0.0
    %282 = vmatpush1.xpose.msra.mxu0 0.0
    %283 = vmatprep.subr.mxu0 0.0
    %284 = vmatpush1.xpose.msra.mxu0 0.0
    %285 = vmatprep.subr.mxu0 0.0
    %286 = vmatpush1.xpose.msra.mxu0 0.0
    %287 = vmatprep.subr.mxu0 0.0
    %288 = vmatpush1.xpose.msra.mxu0 0.0
    %289 = vmatprep.subr.mxu0 0.0
    %290 = vmatpush1.xpose.msra.mxu0 0.0
    %291 = vmatprep.subr.mxu0 0.0
    %292 = vmatpush1.xpose.msra.mxu0 0.0
    %293 = vmatprep.subr.mxu0 0.0
    %294 = vmatpush1.xpose.msra.mxu0 0.0
    %295 = vmatprep.mubr.f32.mxu0 0.0
    %296 = vmatmul.mubr.f32.gmra.mrb[0].mxu0 %v227
    %v297 = vpop.f32.mrb[0].mxu0
    %v298 = vadd.f32 %v221, %v297
    %v299 = vpop.f32.mrb[0].mxu0
    %300 = vdwg.mxu0
    %v301 = vsel %vm226, %v298, -inf
    %302 = vmax.xlane.f32.xlu0 %v301
    %v303 = vpop.xlane.xlu0 %302
    %v304 = vsub.f32 %v298, %v303
    %v305 = vmul.f32 %v304, 1.442695
    %v306 = vpow.pop %v305
    %v307 = vsel %vm226, %v306, 0.0
    %308 = vadd.xlane.f32.xlu0 %v307
    %v309 = vpop.xlane.xlu0 %308
    %v310 = vrcp.pop %v309
    %v311 = vmul.f32 %v306, %v310
    %312 = vrot.lane.b32.xlu0 %v208, 64
    %v313 = vpop.permute.xlu0 %312
    %v316 = vsel %vm226, %v311, 0
    %318 = vmatprep.subr.mxu0 0.0
    %319 = vmatpush1.msra.mxu0 %v313
    %320 = vmatprep.subr.mxu0 0.0
    %321 = vmatpush1.msra.mxu0 0.0
    %322 = vmatprep.subr.mxu0 0.0
    %323 = vmatpush1.msra.mxu0 0.0
    %324 = vmatprep.subr.mxu0 0.0
    %325 = vmatpush1.msra.mxu0 0.0
    %326 = vmatprep.subr.mxu0 0.0
    %327 = vmatpush1.msra.mxu0 0.0
    %328 = vmatprep.subr.mxu0 0.0
    %329 = vmatpush1.msra.mxu0 0.0
    %330 = vmatprep.subr.mxu0 0.0
    %331 = vmatpush1.msra.mxu0 0.0
    %332 = vmatprep.subr.mxu0 0.0
    %333 = vmatpush1.msra.mxu0 0.0
    %334 = vmatprep.subr.mxu0 0.0
    %335 = vmatpush1.msra.mxu0 0.0
    %336 = vmatprep.subr.mxu0 0.0
    %337 = vmatpush1.msra.mxu0 0.0
    %338 = vmatprep.subr.mxu0 0.0
    %339 = vmatpush1.msra.mxu0 0.0
    %340 = vmatprep.subr.mxu0 0.0
    %341 = vmatpush1.msra.mxu0 0.0
    %342 = vmatprep.subr.mxu0 0.0
    %343 = vmatpush1.msra.mxu0 0.0
    %344 = vmatprep.subr.mxu0 0.0
    %345 = vmatpush1.msra.mxu0 0.0
    %346 = vmatprep.subr.mxu0 0.0
    %347 = vmatpush1.msra.mxu0 0.0
    %348 = vmatprep.subr.mxu0 0.0
    %349 = vmatpush1.msra.mxu0 0.0
    %350 = vmatprep.subr.mxu0 0.0
    %351 = vmatpush1.msra.mxu0 0.0
    %352 = vmatprep.subr.mxu0 0.0
    %353 = vmatpush1.msra.mxu0 0.0
    %354 = vmatprep.subr.mxu0 0.0
    %355 = vmatpush1.msra.mxu0 0.0
    %356 = vmatprep.subr.mxu0 0.0
    %357 = vmatpush1.msra.mxu0 0.0
    %358 = vmatprep.subr.mxu0 0.0
    %359 = vmatpush1.msra.mxu0 0.0
    %360 = vmatprep.subr.mxu0 0.0
    %361 = vmatpush1.msra.mxu0 0.0
    %362 = vmatprep.subr.mxu0 0.0
    %363 = vmatpush1.msra.mxu0 0.0
    %364 = vmatprep.subr.mxu0 0.0
    %365 = vmatpush1.msra.mxu0 0.0
    %366 = vmatprep.subr.mxu0 0.0
    %367 = vmatpush1.msra.mxu0 0.0
    %368 = vmatprep.subr.mxu0 0.0
    %369 = vmatpush1.msra.mxu0 0.0
    %370 = vmatprep.subr.mxu0 0.0
    %371 = vmatpush1.msra.mxu0 0.0
    %372 = vmatprep.subr.mxu0 0.0
    %373 = vmatpush1.msra.mxu0 0.0
    %374 = vmatprep.subr.mxu0 0.0
    %375 = vmatpush1.msra.mxu0 0.0
    %376 = vmatprep.subr.mxu0 0.0
    %377 = vmatpush1.msra.mxu0 0.0
    %378 = vmatprep.subr.mxu0 0.0
    %379 = vmatpush1.msra.mxu0 0.0
    %380 = vmatprep.subr.mxu0 0.0
    %381 = vmatpush1.msra.mxu0 0.0
    %382 = vmatprep.mubr.f32.mxu0 0.0
    %383 = vmatmul.mubr.f32.gmra.mrb[0].mxu0 %v316
    %v384 = vpop.f32.mrb[0].mxu0
    %v385 = vadd.f32 0.0, %v384
    %v386 = vpop.f32.mrb[0].mxu0
    %387 = vdwg.mxu0
    %v388 = vld [vmem:[%s6] sm:$0xff]
    %389 = vrot.lane.b32.xlu0 %v208, 120
    %v390 = vpop.permute.xlu0 %389
    %391 = vrot.lane.b32.xlu0 %v208, 88
    %v392 = vpop.permute.xlu0 %391
    %v393 = vsel %vm226, %v390, 0
    %v395 = vsel %vm226, %v392, 0
    %397 = vmatprep.subr.mxu0 0.0
    %398 = vmatpush1.xpose.msra.mxu0 %v395
    %399 = vmatprep.subr.mxu0 0.0
    %400 = vmatpush1.xpose.msra.mxu0 0.0
    %401 = vmatprep.subr.mxu0 0.0
    %402 = vmatpush1.xpose.msra.mxu0 0.0
    %403 = vmatprep.subr.mxu0 0.0
    %404 = vmatpush1.xpose.msra.mxu0 0.0
    %405 = vmatprep.subr.mxu0 0.0
    %406 = vmatpush1.xpose.msra.mxu0 0.0
    %407 = vmatprep.subr.mxu0 0.0
    %408 = vmatpush1.xpose.msra.mxu0 0.0
    %409 = vmatprep.subr.mxu0 0.0
    %410 = vmatpush1.xpose.msra.mxu0 0.0
    %411 = vmatprep.subr.mxu0 0.0
    %412 = vmatpush1.xpose.msra.mxu0 0.0
    %413 = vmatprep.subr.mxu0 0.0
    %414 = vmatpush1.xpose.msra.mxu0 0.0
    %415 = vmatprep.subr.mxu0 0.0
    %416 = vmatpush1.xpose.msra.mxu0 0.0
    %417 = vmatprep.subr.mxu0 0.0
    %418 = vmatpush1.xpose.msra.mxu0 0.0
    %419 = vmatprep.subr.mxu0 0.0
    %420 = vmatpush1.xpose.msra.mxu0 0.0
    %421 = vmatprep.subr.mxu0 0.0
    %422 = vmatpush1.xpose.msra.mxu0 0.0
    %423 = vmatprep.subr.mxu0 0.0
    %424 = vmatpush1.xpose.msra.mxu0 0.0
    %425 = vmatprep.subr.mxu0 0.0
    %426 = vmatpush1.xpose.msra.mxu0 0.0
    %427 = vmatprep.subr.mxu0 0.0
    %428 = vmatpush1.xpose.msra.mxu0 0.0
    %429 = vmatprep.subr.mxu0 0.0
    %430 = vmatpush1.xpose.msra.mxu0 0.0
    %431 = vmatprep.subr.mxu0 0.0
    %432 = vmatpush1.xpose.msra.mxu0 0.0
    %433 = vmatprep.subr.mxu0 0.0
    %434 = vmatpush1.xpose.msra.mxu0 0.0
    %435 = vmatprep.subr.mxu0 0.0
    %436 = vmatpush1.xpose.msra.mxu0 0.0
    %437 = vmatprep.subr.mxu0 0.0
    %438 = vmatpush1.xpose.msra.mxu0 0.0
    %439 = vmatprep.subr.mxu0 0.0
    %440 = vmatpush1.xpose.msra.mxu0 0.0
    %441 = vmatprep.subr.mxu0 0.0
    %442 = vmatpush1.xpose.msra.mxu0 0.0
    %443 = vmatprep.subr.mxu0 0.0
    %444 = vmatpush1.xpose.msra.mxu0 0.0
    %445 = vmatprep.subr.mxu0 0.0
    %446 = vmatpush1.xpose.msra.mxu0 0.0
    %447 = vmatprep.subr.mxu0 0.0
    %448 = vmatpush1.xpose.msra.mxu0 0.0
    %449 = vmatprep.subr.mxu0 0.0
    %450 = vmatpush1.xpose.msra.mxu0 0.0
    %451 = vmatprep.subr.mxu0 0.0
    %452 = vmatpush1.xpose.msra.mxu0 0.0
    %453 = vmatprep.subr.mxu0 0.0
    %454 = vmatpush1.xpose.msra.mxu0 0.0
    %455 = vmatprep.subr.mxu0 0.0
    %456 = vmatpush1.xpose.msra.mxu0 0.0
    %457 = vmatprep.subr.mxu0 0.0
    %458 = vmatpush1.xpose.msra.mxu0 0.0
    %459 = vmatprep.subr.mxu0 0.0
    %460 = vmatpush1.xpose.msra.mxu0 0.0
    %461 = vmatprep.mubr.f32.mxu0 0.0
    %462 = vmatmul.mubr.f32.gmra.mrb[0].mxu0 %v393
    %v463 = vpop.f32.mrb[0].mxu0
    %v464 = vadd.f32 %v221, %v463
    %v465 = vpop.f32.mrb[0].mxu0
    %466 = vdwg.mxu0
    %v467 = vsel %vm226, %v464, -inf
    %468 = vmax.xlane.f32.xlu0 %v467
    %v469 = vpop.xlane.xlu0 %468
    %v470 = vsub.f32 %v464, %v469
    %v471 = vmul.f32 %v470, 1.442695
    %v472 = vpow.pop %v471
    %v473 = vsel %vm226, %v472, 0.0
    %474 = vadd.xlane.f32.xlu0 %v473
    %v475 = vpop.xlane.xlu0 %474
    %v476 = vrcp.pop %v475
    %v477 = vmul.f32 %v472, %v476
    %478 = vrot.lane.b32.xlu0 %v208, 56
    %v479 = vpop.permute.xlu0 %478
    %v482 = vsel %vm226, %v477, 0
    %484 = vmatprep.subr.mxu0 0.0
    %485 = vmatpush1.msra.mxu0 %v479
    %486 = vmatprep.subr.mxu0 0.0
    %487 = vmatpush1.msra.mxu0 0.0
    %488 = vmatprep.subr.mxu0 0.0
    %489 = vmatpush1.msra.mxu0 0.0
    %490 = vmatprep.subr.mxu0 0.0
    %491 = vmatpush1.msra.mxu0 0.0
    %492 = vmatprep.subr.mxu0 0.0
    %493 = vmatpush1.msra.mxu0 0.0
    %494 = vmatprep.subr.mxu0 0.0
    %495 = vmatpush1.msra.mxu0 0.0
    %496 = vmatprep.subr.mxu0 0.0
    %497 = vmatpush1.msra.mxu0 0.0
    %498 = vmatprep.subr.mxu0 0.0
    %499 = vmatpush1.msra.mxu0 0.0
    %500 = vmatprep.subr.mxu0 0.0
    %501 = vmatpush1.msra.mxu0 0.0
    %502 = vmatprep.subr.mxu0 0.0
    %503 = vmatpush1.msra.mxu0 0.0
    %504 = vmatprep.subr.mxu0 0.0
    %505 = vmatpush1.msra.mxu0 0.0
    %506 = vmatprep.subr.mxu0 0.0
    %507 = vmatpush1.msra.mxu0 0.0
    %508 = vmatprep.subr.mxu0 0.0
    %509 = vmatpush1.msra.mxu0 0.0
    %510 = vmatprep.subr.mxu0 0.0
    %511 = vmatpush1.msra.mxu0 0.0
    %512 = vmatprep.subr.mxu0 0.0
    %513 = vmatpush1.msra.mxu0 0.0
    %514 = vmatprep.subr.mxu0 0.0
    %515 = vmatpush1.msra.mxu0 0.0
    %516 = vmatprep.subr.mxu0 0.0
    %517 = vmatpush1.msra.mxu0 0.0
    %518 = vmatprep.subr.mxu0 0.0
    %519 = vmatpush1.msra.mxu0 0.0
    %520 = vmatprep.subr.mxu0 0.0
    %521 = vmatpush1.msra.mxu0 0.0
    %522 = vmatprep.subr.mxu0 0.0
    %523 = vmatpush1.msra.mxu0 0.0
    %524 = vmatprep.subr.mxu0 0.0
    %525 = vmatpush1.msra.mxu0 0.0
    %526 = vmatprep.subr.mxu0 0.0
    %527 = vmatpush1.msra.mxu0 0.0
    %528 = vmatprep.subr.mxu0 0.0
    %529 = vmatpush1.msra.mxu0 0.0
    %530 = vmatprep.subr.mxu0 0.0
    %531 = vmatpush1.msra.mxu0 0.0
    %532 = vmatprep.subr.mxu0 0.0
    %533 = vmatpush1.msra.mxu0 0.0
    %534 = vmatprep.subr.mxu0 0.0
    %535 = vmatpush1.msra.mxu0 0.0
    %536 = vmatprep.subr.mxu0 0.0
    %537 = vmatpush1.msra.mxu0 0.0
    %538 = vmatprep.subr.mxu0 0.0
    %539 = vmatpush1.msra.mxu0 0.0
    %540 = vmatprep.subr.mxu0 0.0
    %541 = vmatpush1.msra.mxu0 0.0
    %542 = vmatprep.subr.mxu0 0.0
    %543 = vmatpush1.msra.mxu0 0.0
    %544 = vmatprep.subr.mxu0 0.0
    %545 = vmatpush1.msra.mxu0 0.0
    %546 = vmatprep.subr.mxu0 0.0
    %547 = vmatpush1.msra.mxu0 0.0
    %548 = vmatprep.mubr.f32.mxu0 0.0
    %549 = vmatmul.mubr.f32.gmra.mrb[0].mxu0 %v482
    %v550 = vpop.f32.mrb[0].mxu0
    %v551 = vadd.f32 0.0, %v550
    %v552 = vpop.f32.mrb[0].mxu0
    %553 = vdwg.mxu0
    %s554 = scalar_lea.vmem %s6, 8
    %v555 = vld [vmem:[%s554] sm:$0xff]
    %v557 = vsel %vm226, %v551, 0
    %559 = vmatprep.subr.mxu0 0.0
    %560 = vmatpush1.msra.mxu0 %v555
    %561 = vmatprep.subr.mxu0 0.0
    %562 = vmatpush1.msra.mxu0 0.0
    %563 = vmatprep.subr.mxu0 0.0
    %564 = vmatpush1.msra.mxu0 0.0
    %565 = vmatprep.subr.mxu0 0.0
    %566 = vmatpush1.msra.mxu0 0.0
    %567 = vmatprep.subr.mxu0 0.0
    %568 = vmatpush1.msra.mxu0 0.0
    %569 = vmatprep.subr.mxu0 0.0
    %570 = vmatpush1.msra.mxu0 0.0
    %571 = vmatprep.subr.mxu0 0.0
    %572 = vmatpush1.msra.mxu0 0.0
    %573 = vmatprep.subr.mxu0 0.0
    %574 = vmatpush1.msra.mxu0 0.0
    %575 = vmatprep.subr.mxu0 0.0
    %576 = vmatpush1.msra.mxu0 0.0
    %577 = vmatprep.subr.mxu0 0.0
    %578 = vmatpush1.msra.mxu0 0.0
    %579 = vmatprep.subr.mxu0 0.0
    %580 = vmatpush1.msra.mxu0 0.0
    %581 = vmatprep.subr.mxu0 0.0
    %582 = vmatpush1.msra.mxu0 0.0
    %583 = vmatprep.subr.mxu0 0.0
    %584 = vmatpush1.msra.mxu0 0.0
    %585 = vmatprep.subr.mxu0 0.0
    %586 = vmatpush1.msra.mxu0 0.0
    %587 = vmatprep.subr.mxu0 0.0
    %588 = vmatpush1.msra.mxu0 0.0
    %589 = vmatprep.subr.mxu0 0.0
    %590 = vmatpush1.msra.mxu0 0.0
    %591 = vmatprep.subr.mxu0 0.0
    %592 = vmatpush1.msra.mxu0 0.0
    %593 = vmatprep.subr.mxu0 0.0
    %594 = vmatpush1.msra.mxu0 0.0
    %595 = vmatprep.subr.mxu0 0.0
    %596 = vmatpush1.msra.mxu0 0.0
    %597 = vmatprep.subr.mxu0 0.0
    %598 = vmatpush1.msra.mxu0 0.0
    %599 = vmatprep.subr.mxu0 0.0
    %600 = vmatpush1.msra.mxu0 0.0
    %601 = vmatprep.subr.mxu0 0.0
    %602 = vmatpush1.msra.mxu0 0.0
    %603 = vmatprep.subr.mxu0 0.0
    %604 = vmatpush1.msra.mxu0 0.0
    %605 = vmatprep.subr.mxu0 0.0
    %606 = vmatpush1.msra.mxu0 0.0
    %607 = vmatprep.subr.mxu0 0.0
    %608 = vmatpush1.msra.mxu0 0.0
    %609 = vmatprep.subr.mxu0 0.0
    %610 = vmatpush1.msra.mxu0 0.0
    %611 = vmatprep.subr.mxu0 0.0
    %612 = vmatpush1.msra.mxu0 0.0
    %613 = vmatprep.subr.mxu0 0.0
    %614 = vmatpush1.msra.mxu0 0.0
    %615 = vmatprep.subr.mxu0 0.0
    %616 = vmatpush1.msra.mxu0 0.0
    %617 = vmatprep.subr.mxu0 0.0
    %618 = vmatpush1.msra.mxu0 0.0
    %619 = vmatprep.subr.mxu0 0.0
    %620 = vmatpush1.msra.mxu0 0.0
    %621 = vmatprep.subr.mxu0 0.0
    %622 = vmatpush1.msra.mxu0 0.0
    %623 = vmatprep.mubr.f32.mxu0 0.0
    %624 = vmatmul.mubr.f32.gmra.mrb[0].mxu0 %v557
    %v625 = vpop.f32.mrb[0].mxu0
    %v626 = vadd.f32 0.0, %v625
    %v627 = vpop.f32.mrb[0].mxu0
    %628 = vdwg.mxu0
    %v630 = vsel %vm226, %v385, 0
    %632 = vmatprep.subr.mxu0 0.0
    %633 = vmatpush1.msra.mxu0 %v388
    %634 = vmatprep.subr.mxu0 0.0
    %635 = vmatpush1.msra.mxu0 0.0
    %636 = vmatprep.subr.mxu0 0.0
    %637 = vmatpush1.msra.mxu0 0.0
    %638 = vmatprep.subr.mxu0 0.0
    %639 = vmatpush1.msra.mxu0 0.0
    %640 = vmatprep.subr.mxu0 0.0
    %641 = vmatpush1.msra.mxu0 0.0
    %642 = vmatprep.subr.mxu0 0.0
    %643 = vmatpush1.msra.mxu0 0.0
    %644 = vmatprep.subr.mxu0 0.0
    %645 = vmatpush1.msra.mxu0 0.0
    %646 = vmatprep.subr.mxu0 0.0
    %647 = vmatpush1.msra.mxu0 0.0
    %648 = vmatprep.subr.mxu0 0.0
    %649 = vmatpush1.msra.mxu0 0.0
    %650 = vmatprep.subr.mxu0 0.0
    %651 = vmatpush1.msra.mxu0 0.0
    %652 = vmatprep.subr.mxu0 0.0
    %653 = vmatpush1.msra.mxu0 0.0
    %654 = vmatprep.subr.mxu0 0.0
    %655 = vmatpush1.msra.mxu0 0.0
    %656 = vmatprep.subr.mxu0 0.0
    %657 = vmatpush1.msra.mxu0 0.0
    %658 = vmatprep.subr.mxu0 0.0
    %659 = vmatpush1.msra.mxu0 0.0
    %660 = vmatprep.subr.mxu0 0.0
    %661 = vmatpush1.msra.mxu0 0.0
    %662 = vmatprep.subr.mxu0 0.0
    %663 = vmatpush1.msra.mxu0 0.0
    %664 = vmatprep.subr.mxu0 0.0
    %665 = vmatpush1.msra.mxu0 0.0
    %666 = vmatprep.subr.mxu0 0.0
    %667 = vmatpush1.msra.mxu0 0.0
    %668 = vmatprep.subr.mxu0 0.0
    %669 = vmatpush1.msra.mxu0 0.0
    %670 = vmatprep.subr.mxu0 0.0
    %671 = vmatpush1.msra.mxu0 0.0
    %672 = vmatprep.subr.mxu0 0.0
    %673 = vmatpush1.msra.mxu0 0.0
    %674 = vmatprep.subr.mxu0 0.0
    %675 = vmatpush1.msra.mxu0 0.0
    %676 = vmatprep.subr.mxu0 0.0
    %677 = vmatpush1.msra.mxu0 0.0
    %678 = vmatprep.subr.mxu0 0.0
    %679 = vmatpush1.msra.mxu0 0.0
    %680 = vmatprep.subr.mxu0 0.0
    %681 = vmatpush1.msra.mxu0 0.0
    %682 = vmatprep.subr.mxu0 0.0
    %683 = vmatpush1.msra.mxu0 0.0
    %684 = vmatprep.subr.mxu0 0.0
    %685 = vmatpush1.msra.mxu0 0.0
    %686 = vmatprep.subr.mxu0 0.0
    %687 = vmatpush1.msra.mxu0 0.0
    %688 = vmatprep.subr.mxu0 0.0
    %689 = vmatpush1.msra.mxu0 0.0
    %690 = vmatprep.subr.mxu0 0.0
    %691 = vmatpush1.msra.mxu0 0.0
    %692 = vmatprep.subr.mxu0 0.0
    %693 = vmatpush1.msra.mxu0 0.0
    %694 = vmatprep.subr.mxu0 0.0
    %695 = vmatpush1.msra.mxu0 0.0
    %696 = vmatprep.mubr.f32.mxu0 0.0
    %697 = vmatmul.mubr.f32.gmra.mrb[0].mxu0 %v630
    %v698 = vpop.f32.mrb[0].mxu0
    %v699 = vadd.f32 %v626, %v698
    %v700 = vpop.f32.mrb[0].mxu0
    %701 = vdwg.mxu0
    %702 = vrot.lane.b32.xlu0 %v208, 112
    %v703 = vpop.permute.xlu0 %702
    %704 = vrot.lane.b32.xlu0 %v208, 80
    %v705 = vpop.permute.xlu0 %704
    %v706 = vsel %vm226, %v703, 0
    %v708 = vsel %vm226, %v705, 0
    %710 = vmatprep.subr.mxu0 0.0
    %711 = vmatpush1.xpose.msra.mxu0 %v708
    %712 = vmatprep.subr.mxu0 0.0
    %713 = vmatpush1.xpose.msra.mxu0 0.0
    %714 = vmatprep.subr.mxu0 0.0
    %715 = vmatpush1.xpose.msra.mxu0 0.0
    %716 = vmatprep.subr.mxu0 0.0
    %717 = vmatpush1.xpose.msra.mxu0 0.0
    %718 = vmatprep.subr.mxu0 0.0
    %719 = vmatpush1.xpose.msra.mxu0 0.0
    %720 = vmatprep.subr.mxu0 0.0
    %721 = vmatpush1.xpose.msra.mxu0 0.0
    %722 = vmatprep.subr.mxu0 0.0
    %723 = vmatpush1.xpose.msra.mxu0 0.0
    %724 = vmatprep.subr.mxu0 0.0
    %725 = vmatpush1.xpose.msra.mxu0 0.0
    %726 = vmatprep.subr.mxu0 0.0
    %727 = vmatpush1.xpose.msra.mxu0 0.0
    %728 = vmatprep.subr.mxu0 0.0
    %729 = vmatpush1.xpose.msra.mxu0 0.0
    %730 = vmatprep.subr.mxu0 0.0
    %731 = vmatpush1.xpose.msra.mxu0 0.0
    %732 = vmatprep.subr.mxu0 0.0
    %733 = vmatpush1.xpose.msra.mxu0 0.0
    %734 = vmatprep.subr.mxu0 0.0
    %735 = vmatpush1.xpose.msra.mxu0 0.0
    %736 = vmatprep.subr.mxu0 0.0
    %737 = vmatpush1.xpose.msra.mxu0 0.0
    %738 = vmatprep.subr.mxu0 0.0
    %739 = vmatpush1.xpose.msra.mxu0 0.0
    %740 = vmatprep.subr.mxu0 0.0
    %741 = vmatpush1.xpose.msra.mxu0 0.0
    %742 = vmatprep.subr.mxu0 0.0
    %743 = vmatpush1.xpose.msra.mxu0 0.0
    %744 = vmatprep.subr.mxu0 0.0
    %745 = vmatpush1.xpose.msra.mxu0 0.0
    %746 = vmatprep.subr.mxu0 0.0
    %747 = vmatpush1.xpose.msra.mxu0 0.0
    %748 = vmatprep.subr.mxu0 0.0
    %749 = vmatpush1.xpose.msra.mxu0 0.0
    %750 = vmatprep.subr.mxu0 0.0
    %751 = vmatpush1.xpose.msra.mxu0 0.0
    %752 = vmatprep.subr.mxu0 0.0
    %753 = vmatpush1.xpose.msra.mxu0 0.0
    %754 = vmatprep.subr.mxu0 0.0
    %755 = vmatpush1.xpose.msra.mxu0 0.0
    %756 = vmatprep.subr.mxu0 0.0
    %757 = vmatpush1.xpose.msra.mxu0 0.0
    %758 = vmatprep.subr.mxu0 0.0
    %759 = vmatpush1.xpose.msra.mxu0 0.0
    %760 = vmatprep.subr.mxu0 0.0
    %761 = vmatpush1.xpose.msra.mxu0 0.0
    %762 = vmatprep.subr.mxu0 0.0
    %763 = vmatpush1.xpose.msra.mxu0 0.0
    %764 = vmatprep.subr.mxu0 0.0
    %765 = vmatpush1.xpose.msra.mxu0 0.0
    %766 = vmatprep.subr.mxu0 0.0
    %767 = vmatpush1.xpose.msra.mxu0 0.0
    %768 = vmatprep.subr.mxu0 0.0
    %769 = vmatpush1.xpose.msra.mxu0 0.0
    %770 = vmatprep.subr.mxu0 0.0
    %771 = vmatpush1.xpose.msra.mxu0 0.0
    %772 = vmatprep.subr.mxu0 0.0
    %773 = vmatpush1.xpose.msra.mxu0 0.0
    %774 = vmatprep.mubr.f32.mxu0 0.0
    %775 = vmatmul.mubr.f32.gmra.mrb[0].mxu0 %v706
    %v776 = vpop.f32.mrb[0].mxu0
    %v777 = vadd.f32 %v221, %v776
    %v778 = vpop.f32.mrb[0].mxu0
    %779 = vdwg.mxu0
    %v780 = vsel %vm226, %v777, -inf
    %781 = vmax.xlane.f32.xlu0 %v780
    %v782 = vpop.xlane.xlu0 %781
    %v783 = vsub.f32 %v777, %v782
    %v784 = vmul.f32 %v783, 1.442695
    %v785 = vpow.pop %v784
    %v786 = vsel %vm226, %v785, 0.0
    %787 = vadd.xlane.f32.xlu0 %v786
    %v788 = vpop.xlane.xlu0 %787
    %v789 = vrcp.pop %v788
    %v790 = vmul.f32 %v785, %v789
    %791 = vrot.lane.b32.xlu0 %v208, 48
    %v792 = vpop.permute.xlu0 %791
    %v795 = vsel %vm226, %v790, 0
    %797 = vmatprep.subr.mxu0 0.0
    %798 = vmatpush1.msra.mxu0 %v792
    %799 = vmatprep.subr.mxu0 0.0
    %800 = vmatpush1.msra.mxu0 0.0
    %801 = vmatprep.subr.mxu0 0.0
    %802 = vmatpush1.msra.mxu0 0.0
    %803 = vmatprep.subr.mxu0 0.0
    %804 = vmatpush1.msra.mxu0 0.0
    %805 = vmatprep.subr.mxu0 0.0
    %806 = vmatpush1.msra.mxu0 0.0
    %807 = vmatprep.subr.mxu0 0.0
    %808 = vmatpush1.msra.mxu0 0.0
    %809 = vmatprep.subr.mxu0 0.0
    %810 = vmatpush1.msra.mxu0 0.0
    %811 = vmatprep.subr.mxu0 0.0
    %812 = vmatpush1.msra.mxu0 0.0
    %813 = vmatprep.subr.mxu0 0.0
    %814 = vmatpush1.msra.mxu0 0.0
    %815 = vmatprep.subr.mxu0 0.0
    %816 = vmatpush1.msra.mxu0 0.0
    %817 = vmatprep.subr.mxu0 0.0
    %818 = vmatpush1.msra.mxu0 0.0
    %819 = vmatprep.subr.mxu0 0.0
    %820 = vmatpush1.msra.mxu0 0.0
    %821 = vmatprep.subr.mxu0 0.0
    %822 = vmatpush1.msra.mxu0 0.0
    %823 = vmatprep.subr.mxu0 0.0
    %824 = vmatpush1.msra.mxu0 0.0
    %825 = vmatprep.subr.mxu0 0.0
    %826 = vmatpush1.msra.mxu0 0.0
    %827 = vmatprep.subr.mxu0 0.0
    %828 = vmatpush1.msra.mxu0 0.0
    %829 = vmatprep.subr.mxu0 0.0
    %830 = vmatpush1.msra.mxu0 0.0
    %831 = vmatprep.subr.mxu0 0.0
    %832 = vmatpush1.msra.mxu0 0.0
    %833 = vmatprep.subr.mxu0 0.0
    %834 = vmatpush1.msra.mxu0 0.0
    %835 = vmatprep.subr.mxu0 0.0
    %836 = vmatpush1.msra.mxu0 0.0
    %837 = vmatprep.subr.mxu0 0.0
    %838 = vmatpush1.msra.mxu0 0.0
    %839 = vmatprep.subr.mxu0 0.0
    %840 = vmatpush1.msra.mxu0 0.0
    %841 = vmatprep.subr.mxu0 0.0
    %842 = vmatpush1.msra.mxu0 0.0
    %843 = vmatprep.subr.mxu0 0.0
    %844 = vmatpush1.msra.mxu0 0.0
    %845 = vmatprep.subr.mxu0 0.0
    %846 = vmatpush1.msra.mxu0 0.0
    %847 = vmatprep.subr.mxu0 0.0
    %848 = vmatpush1.msra.mxu0 0.0
    %849 = vmatprep.subr.mxu0 0.0
    %850 = vmatpush1.msra.mxu0 0.0
    %851 = vmatprep.subr.mxu0 0.0
    %852 = vmatpush1.msra.mxu0 0.0
    %853 = vmatprep.subr.mxu0 0.0
    %854 = vmatpush1.msra.mxu0 0.0
    %855 = vmatprep.subr.mxu0 0.0
    %856 = vmatpush1.msra.mxu0 0.0
    %857 = vmatprep.subr.mxu0 0.0
    %858 = vmatpush1.msra.mxu0 0.0
    %859 = vmatprep.subr.mxu0 0.0
    %860 = vmatpush1.msra.mxu0 0.0
    %861 = vmatprep.mubr.f32.mxu0 0.0
    %862 = vmatmul.mubr.f32.gmra.mrb[0].mxu0 %v795
    %v863 = vpop.f32.mrb[0].mxu0
    %v864 = vadd.f32 0.0, %v863
    %v865 = vpop.f32.mrb[0].mxu0
    %866 = vdwg.mxu0
    %s867 = scalar_lea.vmem %s6, 16
    %v868 = vld [vmem:[%s867] sm:$0xff]
    %v870 = vsel %vm226, %v864, 0
    %872 = vmatprep.subr.mxu0 0.0
    %873 = vmatpush1.msra.mxu0 %v868
    %874 = vmatprep.subr.mxu0 0.0
    %875 = vmatpush1.msra.mxu0 0.0
    %876 = vmatprep.subr.mxu0 0.0
    %877 = vmatpush1.msra.mxu0 0.0
    %878 = vmatprep.subr.mxu0 0.0
    %879 = vmatpush1.msra.mxu0 0.0
    %880 = vmatprep.subr.mxu0 0.0
    %881 = vmatpush1.msra.mxu0 0.0
    %882 = vmatprep.subr.mxu0 0.0
    %883 = vmatpush1.msra.mxu0 0.0
    %884 = vmatprep.subr.mxu0 0.0
    %885 = vmatpush1.msra.mxu0 0.0
    %886 = vmatprep.subr.mxu0 0.0
    %887 = vmatpush1.msra.mxu0 0.0
    %888 = vmatprep.subr.mxu0 0.0
    %889 = vmatpush1.msra.mxu0 0.0
    %890 = vmatprep.subr.mxu0 0.0
    %891 = vmatpush1.msra.mxu0 0.0
    %892 = vmatprep.subr.mxu0 0.0
    %893 = vmatpush1.msra.mxu0 0.0
    %894 = vmatprep.subr.mxu0 0.0
    %895 = vmatpush1.msra.mxu0 0.0
    %896 = vmatprep.subr.mxu0 0.0
    %897 = vmatpush1.msra.mxu0 0.0
    %898 = vmatprep.subr.mxu0 0.0
    %899 = vmatpush1.msra.mxu0 0.0
    %900 = vmatprep.subr.mxu0 0.0
    %901 = vmatpush1.msra.mxu0 0.0
    %902 = vmatprep.subr.mxu0 0.0
    %903 = vmatpush1.msra.mxu0 0.0
    %904 = vmatprep.subr.mxu0 0.0
    %905 = vmatpush1.msra.mxu0 0.0
    %906 = vmatprep.subr.mxu0 0.0
    %907 = vmatpush1.msra.mxu0 0.0
    %908 = vmatprep.subr.mxu0 0.0
    %909 = vmatpush1.msra.mxu0 0.0
    %910 = vmatprep.subr.mxu0 0.0
    %911 = vmatpush1.msra.mxu0 0.0
    %912 = vmatprep.subr.mxu0 0.0
    %913 = vmatpush1.msra.mxu0 0.0
    %914 = vmatprep.subr.mxu0 0.0
    %915 = vmatpush1.msra.mxu0 0.0
    %916 = vmatprep.subr.mxu0 0.0
    %917 = vmatpush1.msra.mxu0 0.0
    %918 = vmatprep.subr.mxu0 0.0
    %919 = vmatpush1.msra.mxu0 0.0
    %920 = vmatprep.subr.mxu0 0.0
    %921 = vmatpush1.msra.mxu0 0.0
    %922 = vmatprep.subr.mxu0 0.0
    %923 = vmatpush1.msra.mxu0 0.0
    %924 = vmatprep.subr.mxu0 0.0
    %925 = vmatpush1.msra.mxu0 0.0
    %926 = vmatprep.subr.mxu0 0.0
    %927 = vmatpush1.msra.mxu0 0.0
    %928 = vmatprep.subr.mxu0 0.0
    %929 = vmatpush1.msra.mxu0 0.0
    %930 = vmatprep.subr.mxu0 0.0
    %931 = vmatpush1.msra.mxu0 0.0
    %932 = vmatprep.subr.mxu0 0.0
    %933 = vmatpush1.msra.mxu0 0.0
    %934 = vmatprep.subr.mxu0 0.0
    %935 = vmatpush1.msra.mxu0 0.0
    %936 = vmatprep.mubr.f32.mxu0 0.0
    %937 = vmatmul.mubr.f32.gmra.mrb[0].mxu0 %v870
    %v938 = vpop.f32.mrb[0].mxu0
    %v939 = vadd.f32 0.0, %v938
    %v940 = vpop.f32.mrb[0].mxu0
    %941 = vdwg.mxu0
    %v942 = vadd.f32 %v699, %v939
    %943 = vrot.lane.b32.xlu0 %v208, 104
    %v944 = vpop.permute.xlu0 %943
    %945 = vrot.lane.b32.xlu0 %v208, 72
    %v946 = vpop.permute.xlu0 %945
    %v947 = vsel %vm226, %v944, 0
    %v949 = vsel %vm226, %v946, 0
    %951 = vmatprep.subr.mxu0 0.0
    %952 = vmatpush1.xpose.msra.mxu0 %v949
    %953 = vmatprep.subr.mxu0 0.0
    %954 = vmatpush1.xpose.msra.mxu0 0.0
    %955 = vmatprep.subr.mxu0 0.0
    %956 = vmatpush1.xpose.msra.mxu0 0.0
    %957 = vmatprep.subr.mxu0 0.0
    %958 = vmatpush1.xpose.msra.mxu0 0.0
    %959 = vmatprep.subr.mxu0 0.0
    %960 = vmatpush1.xpose.msra.mxu0 0.0
    %961 = vmatprep.subr.mxu0 0.0
    %962 = vmatpush1.xpose.msra.mxu0 0.0
    %963 = vmatprep.subr.mxu0 0.0
    %964 = vmatpush1.xpose.msra.mxu0 0.0
    %965 = vmatprep.subr.mxu0 0.0
    %966 = vmatpush1.xpose.msra.mxu0 0.0
    %967 = vmatprep.subr.mxu0 0.0
    %968 = vmatpush1.xpose.msra.mxu0 0.0
    %969 = vmatprep.subr.mxu0 0.0
    %970 = vmatpush1.xpose.msra.mxu0 0.0
    %971 = vmatprep.subr.mxu0 0.0
    %972 = vmatpush1.xpose.msra.mxu0 0.0
    %973 = vmatprep.subr.mxu0 0.0
    %974 = vmatpush1.xpose.msra.mxu0 0.0
    %975 = vmatprep.subr.mxu0 0.0
    %976 = vmatpush1.xpose.msra.mxu0 0.0
    %977 = vmatprep.subr.mxu0 0.0
    %978 = vmatpush1.xpose.msra.mxu0 0.0
    %979 = vmatprep.subr.mxu0 0.0
    %980 = vmatpush1.xpose.msra.mxu0 0.0
    %981 = vmatprep.subr.mxu0 0.0
    %982 = vmatpush1.xpose.msra.mxu0 0.0
    %983 = vmatprep.subr.mxu0 0.0
    %984 = vmatpush1.xpose.msra.mxu0 0.0
    %985 = vmatprep.subr.mxu0 0.0
    %986 = vmatpush1.xpose.msra.mxu0 0.0
    %987 = vmatprep.subr.mxu0 0.0
    %988 = vmatpush1.xpose.msra.mxu0 0.0
    %989 = vmatprep.subr.mxu0 0.0
    %990 = vmatpush1.xpose.msra.mxu0 0.0
    %991 = vmatprep.subr.mxu0 0.0
    %992 = vmatpush1.xpose.msra.mxu0 0.0
    %993 = vmatprep.subr.mxu0 0.0
    %994 = vmatpush1.xpose.msra.mxu0 0.0
    %995 = vmatprep.subr.mxu0 0.0
    %996 = vmatpush1.xpose.msra.mxu0 0.0
    %997 = vmatprep.subr.mxu0 0.0
    %998 = vmatpush1.xpose.msra.mxu0 0.0
    %999 = vmatprep.subr.mxu0 0.0
    %1000 = vmatpush1.xpose.msra.mxu0 0.0
    %1001 = vmatprep.subr.mxu0 0.0
    %1002 = vmatpush1.xpose.msra.mxu0 0.0
    %1003 = vmatprep.subr.mxu0 0.0
    %1004 = vmatpush1.xpose.msra.mxu0 0.0
    %1005 = vmatprep.subr.mxu0 0.0
    %1006 = vmatpush1.xpose.msra.mxu0 0.0
    %1007 = vmatprep.subr.mxu0 0.0
    %1008 = vmatpush1.xpose.msra.mxu0 0.0
    %1009 = vmatprep.subr.mxu0 0.0
    %1010 = vmatpush1.xpose.msra.mxu0 0.0
    %1011 = vmatprep.subr.mxu0 0.0
    %1012 = vmatpush1.xpose.msra.mxu0 0.0
    %1013 = vmatprep.subr.mxu0 0.0
    %1014 = vmatpush1.xpose.msra.mxu0 0.0
    %1015 = vmatprep.mubr.f32.mxu0 0.0
    %1016 = vmatmul.mubr.f32.gmra.mrb[0].mxu0 %v947
    %v1017 = vpop.f32.mrb[0].mxu0
    %v1018 = vadd.f32 %v221, %v1017
    %v1019 = vpop.f32.mrb[0].mxu0
    %1020 = vdwg.mxu0
    %v1021 = vsel %vm226, %v1018, -inf
    %1022 = vmax.xlane.f32.xlu0 %v1021
    %v1023 = vpop.xlane.xlu0 %1022
    %v1024 = vsub.f32 %v1018, %v1023
    %v1025 = vmul.f32 %v1024, 1.442695
    %v1026 = vpow.pop %v1025
    %v1027 = vsel %vm226, %v1026, 0.0
    %1028 = vadd.xlane.f32.xlu0 %v1027
    %v1029 = vpop.xlane.xlu0 %1028
    %v1030 = vrcp.pop %v1029
    %v1031 = vmul.f32 %v1026, %v1030
    %1032 = vrot.lane.b32.xlu0 %v208, 40
    %v1033 = vpop.permute.xlu0 %1032
    %v1036 = vsel %vm226, %v1031, 0
    %1038 = vmatprep.subr.mxu0 0.0
    %1039 = vmatpush1.msra.mxu0 %v1033
    %1040 = vmatprep.subr.mxu0 0.0
    %1041 = vmatpush1.msra.mxu0 0.0
    %1042 = vmatprep.subr.mxu0 0.0
    %1043 = vmatpush1.msra.mxu0 0.0
    %1044 = vmatprep.subr.mxu0 0.0
    %1045 = vmatpush1.msra.mxu0 0.0
    %1046 = vmatprep.subr.mxu0 0.0
    %1047 = vmatpush1.msra.mxu0 0.0
    %1048 = vmatprep.subr.mxu0 0.0
    %1049 = vmatpush1.msra.mxu0 0.0
    %1050 = vmatprep.subr.mxu0 0.0
    %1051 = vmatpush1.msra.mxu0 0.0
    %1052 = vmatprep.subr.mxu0 0.0
    %1053 = vmatpush1.msra.mxu0 0.0
    %1054 = vmatprep.subr.mxu0 0.0
    %1055 = vmatpush1.msra.mxu0 0.0
    %1056 = vmatprep.subr.mxu0 0.0
    %1057 = vmatpush1.msra.mxu0 0.0
    %1058 = vmatprep.subr.mxu0 0.0
    %1059 = vmatpush1.msra.mxu0 0.0
    %1060 = vmatprep.subr.mxu0 0.0
    %1061 = vmatpush1.msra.mxu0 0.0
    %1062 = vmatprep.subr.mxu0 0.0
    %1063 = vmatpush1.msra.mxu0 0.0
    %1064 = vmatprep.subr.mxu0 0.0
    %1065 = vmatpush1.msra.mxu0 0.0
    %1066 = vmatprep.subr.mxu0 0.0
    %1067 = vmatpush1.msra.mxu0 0.0
    %1068 = vmatprep.subr.mxu0 0.0
    %1069 = vmatpush1.msra.mxu0 0.0
    %1070 = vmatprep.subr.mxu0 0.0
    %1071 = vmatpush1.msra.mxu0 0.0
    %1072 = vmatprep.subr.mxu0 0.0
    %1073 = vmatpush1.msra.mxu0 0.0
    %1074 = vmatprep.subr.mxu0 0.0
    %1075 = vmatpush1.msra.mxu0 0.0
    %1076 = vmatprep.subr.mxu0 0.0
    %1077 = vmatpush1.msra.mxu0 0.0
    %1078 = vmatprep.subr.mxu0 0.0
    %1079 = vmatpush1.msra.mxu0 0.0
    %1080 = vmatprep.subr.mxu0 0.0
    %1081 = vmatpush1.msra.mxu0 0.0
    %1082 = vmatprep.subr.mxu0 0.0
    %1083 = vmatpush1.msra.mxu0 0.0
    %1084 = vmatprep.subr.mxu0 0.0
    %1085 = vmatpush1.msra.mxu0 0.0
    %1086 = vmatprep.subr.mxu0 0.0
    %1087 = vmatpush1.msra.mxu0 0.0
    %1088 = vmatprep.subr.mxu0 0.0
    %1089 = vmatpush1.msra.mxu0 0.0
    %1090 = vmatprep.subr.mxu0 0.0
    %1091 = vmatpush1.msra.mxu0 0.0
    %1092 = vmatprep.subr.mxu0 0.0
    %1093 = vmatpush1.msra.mxu0 0.0
    %1094 = vmatprep.subr.mxu0 0.0
    %1095 = vmatpush1.msra.mxu0 0.0
    %1096 = vmatprep.subr.mxu0 0.0
    %1097 = vmatpush1.msra.mxu0 0.0
    %1098 = vmatprep.subr.mxu0 0.0
    %1099 = vmatpush1.msra.mxu0 0.0
    %1100 = vmatprep.subr.mxu0 0.0
    %1101 = vmatpush1.msra.mxu0 0.0
    %1102 = vmatprep.mubr.f32.mxu0 0.0
    %1103 = vmatmul.mubr.f32.gmra.mrb[0].mxu0 %v1036
    %v1104 = vpop.f32.mrb[0].mxu0
    %v1105 = vadd.f32 0.0, %v1104
    %v1106 = vpop.f32.mrb[0].mxu0
    %1107 = vdwg.mxu0
    %s1108 = scalar_lea.vmem %s6, 24
    %v1109 = vld [vmem:[%s1108] sm:$0xff]
    %v1111 = vsel %vm226, %v1105, 0
    %1113 = vmatprep.subr.mxu0 0.0
    %1114 = vmatpush1.msra.mxu0 %v1109
    %1115 = vmatprep.subr.mxu0 0.0
    %1116 = vmatpush1.msra.mxu0 0.0
    %1117 = vmatprep.subr.mxu0 0.0
    %1118 = vmatpush1.msra.mxu0 0.0
    %1119 = vmatprep.subr.mxu0 0.0
    %1120 = vmatpush1.msra.mxu0 0.0
    %1121 = vmatprep.subr.mxu0 0.0
    %1122 = vmatpush1.msra.mxu0 0.0
    %1123 = vmatprep.subr.mxu0 0.0
    %1124 = vmatpush1.msra.mxu0 0.0
    %1125 = vmatprep.subr.mxu0 0.0
    %1126 = vmatpush1.msra.mxu0 0.0
    %1127 = vmatprep.subr.mxu0 0.0
    %1128 = vmatpush1.msra.mxu0 0.0
    %1129 = vmatprep.subr.mxu0 0.0
    %1130 = vmatpush1.msra.mxu0 0.0
    %1131 = vmatprep.subr.mxu0 0.0
    %1132 = vmatpush1.msra.mxu0 0.0
    %1133 = vmatprep.subr.mxu0 0.0
    %1134 = vmatpush1.msra.mxu0 0.0
    %1135 = vmatprep.subr.mxu0 0.0
    %1136 = vmatpush1.msra.mxu0 0.0
    %1137 = vmatprep.subr.mxu0 0.0
    %1138 = vmatpush1.msra.mxu0 0.0
    %1139 = vmatprep.subr.mxu0 0.0
    %1140 = vmatpush1.msra.mxu0 0.0
    %1141 = vmatprep.subr.mxu0 0.0
    %1142 = vmatpush1.msra.mxu0 0.0
    %1143 = vmatprep.subr.mxu0 0.0
    %1144 = vmatpush1.msra.mxu0 0.0
    %1145 = vmatprep.subr.mxu0 0.0
    %1146 = vmatpush1.msra.mxu0 0.0
    %1147 = vmatprep.subr.mxu0 0.0
    %1148 = vmatpush1.msra.mxu0 0.0
    %1149 = vmatprep.subr.mxu0 0.0
    %1150 = vmatpush1.msra.mxu0 0.0
    %1151 = vmatprep.subr.mxu0 0.0
    %1152 = vmatpush1.msra.mxu0 0.0
    %1153 = vmatprep.subr.mxu0 0.0
    %1154 = vmatpush1.msra.mxu0 0.0
    %1155 = vmatprep.subr.mxu0 0.0
    %1156 = vmatpush1.msra.mxu0 0.0
    %1157 = vmatprep.subr.mxu0 0.0
    %1158 = vmatpush1.msra.mxu0 0.0
    %1159 = vmatprep.subr.mxu0 0.0
    %1160 = vmatpush1.msra.mxu0 0.0
    %1161 = vmatprep.subr.mxu0 0.0
    %1162 = vmatpush1.msra.mxu0 0.0
    %1163 = vmatprep.subr.mxu0 0.0
    %1164 = vmatpush1.msra.mxu0 0.0
    %1165 = vmatprep.subr.mxu0 0.0
    %1166 = vmatpush1.msra.mxu0 0.0
    %1167 = vmatprep.subr.mxu0 0.0
    %1168 = vmatpush1.msra.mxu0 0.0
    %1169 = vmatprep.subr.mxu0 0.0
    %1170 = vmatpush1.msra.mxu0 0.0
    %1171 = vmatprep.subr.mxu0 0.0
    %1172 = vmatpush1.msra.mxu0 0.0
    %1173 = vmatprep.subr.mxu0 0.0
    %1174 = vmatpush1.msra.mxu0 0.0
    %1175 = vmatprep.subr.mxu0 0.0
    %1176 = vmatpush1.msra.mxu0 0.0
    %1177 = vmatprep.mubr.f32.mxu0 0.0
    %1178 = vmatmul.mubr.f32.gmra.mrb[0].mxu0 %v1111
    %v1179 = vpop.f32.mrb[0].mxu0
    %v1180 = vadd.f32 0.0, %v1179
    %v1181 = vpop.f32.mrb[0].mxu0
    %1182 = vdwg.mxu0
    %v1183 = vadd.f32 %v942, %v1180
    %s1184 = scalar_lea.vmem %s1, 1
    %v1185 = vld [vmem:[%s1184] sm:$0x1]
    %v1187 = vlaneseq
    %v1188 = vshrl.u32 %v1187, 7
    %v1189 = vsub.s32 0, %v1188
    %v1190 = vrot.slane %v1185, %v1189
    %1193 = vrot.lane.b32.xlu0 %v213, 96
    %v1194 = vpop.permute.xlu0 %1193
    %v1195 = vsel %vm226, %v213, 0
    %v1197 = vsel %vm226, %v1194, 0
    %1199 = vmatprep.subr.mxu0 0.0
    %1200 = vmatpush1.xpose.msra.mxu0 %v1197
    %1201 = vmatprep.subr.mxu0 0.0
    %1202 = vmatpush1.xpose.msra.mxu0 0.0
    %1203 = vmatprep.subr.mxu0 0.0
    %1204 = vmatpush1.xpose.msra.mxu0 0.0
    %1205 = vmatprep.subr.mxu0 0.0
    %1206 = vmatpush1.xpose.msra.mxu0 0.0
    %1207 = vmatprep.subr.mxu0 0.0
    %1208 = vmatpush1.xpose.msra.mxu0 0.0
    %1209 = vmatprep.subr.mxu0 0.0
    %1210 = vmatpush1.xpose.msra.mxu0 0.0
    %1211 = vmatprep.subr.mxu0 0.0
    %1212 = vmatpush1.xpose.msra.mxu0 0.0
    %1213 = vmatprep.subr.mxu0 0.0
    %1214 = vmatpush1.xpose.msra.mxu0 0.0
    %1215 = vmatprep.subr.mxu0 0.0
    %1216 = vmatpush1.xpose.msra.mxu0 0.0
    %1217 = vmatprep.subr.mxu0 0.0
    %1218 = vmatpush1.xpose.msra.mxu0 0.0
    %1219 = vmatprep.subr.mxu0 0.0
    %1220 = vmatpush1.xpose.msra.mxu0 0.0
    %1221 = vmatprep.subr.mxu0 0.0
    %1222 = vmatpush1.xpose.msra.mxu0 0.0
    %1223 = vmatprep.subr.mxu0 0.0
    %1224 = vmatpush1.xpose.msra.mxu0 0.0
    %1225 = vmatprep.subr.mxu0 0.0
    %1226 = vmatpush1.xpose.msra.mxu0 0.0
    %1227 = vmatprep.subr.mxu0 0.0
    %1228 = vmatpush1.xpose.msra.mxu0 0.0
    %1229 = vmatprep.subr.mxu0 0.0
    %1230 = vmatpush1.xpose.msra.mxu0 0.0
    %1231 = vmatprep.subr.mxu0 0.0
    %1232 = vmatpush1.xpose.msra.mxu0 0.0
    %1233 = vmatprep.subr.mxu0 0.0
    %1234 = vmatpush1.xpose.msra.mxu0 0.0
    %1235 = vmatprep.subr.mxu0 0.0
    %1236 = vmatpush1.xpose.msra.mxu0 0.0
    %1237 = vmatprep.subr.mxu0 0.0
    %1238 = vmatpush1.xpose.msra.mxu0 0.0
    %1239 = vmatprep.subr.mxu0 0.0
    %1240 = vmatpush1.xpose.msra.mxu0 0.0
    %1241 = vmatprep.subr.mxu0 0.0
    %1242 = vmatpush1.xpose.msra.mxu0 0.0
    %1243 = vmatprep.subr.mxu0 0.0
    %1244 = vmatpush1.xpose.msra.mxu0 0.0
    %1245 = vmatprep.subr.mxu0 0.0
    %1246 = vmatpush1.xpose.msra.mxu0 0.0
    %1247 = vmatprep.subr.mxu0 0.0
    %1248 = vmatpush1.xpose.msra.mxu0 0.0
    %1249 = vmatprep.subr.mxu0 0.0
    %1250 = vmatpush1.xpose.msra.mxu0 0.0
    %1251 = vmatprep.subr.mxu0 0.0
    %1252 = vmatpush1.xpose.msra.mxu0 0.0
    %1253 = vmatprep.subr.mxu0 0.0
    %1254 = vmatpush1.xpose.msra.mxu0 0.0
    %1255 = vmatprep.subr.mxu0 0.0
    %1256 = vmatpush1.xpose.msra.mxu0 0.0
    %1257 = vmatprep.subr.mxu0 0.0
    %1258 = vmatpush1.xpose.msra.mxu0 0.0
    %1259 = vmatprep.subr.mxu0 0.0
    %1260 = vmatpush1.xpose.msra.mxu0 0.0
    %1261 = vmatprep.subr.mxu0 0.0
    %1262 = vmatpush1.xpose.msra.mxu0 0.0
    %1263 = vmatprep.mubr.f32.mxu0 0.0
    %1264 = vmatmul.mubr.f32.gmra.mrb[0].mxu0 %v1195
    %v1265 = vpop.f32.mrb[0].mxu0
    %v1266 = vadd.f32 %v1190, %v1265
    %v1267 = vpop.f32.mrb[0].mxu0
    %1268 = vdwg.mxu0
    %v1269 = vsel %vm226, %v1266, -inf
    %1270 = vmax.xlane.f32.xlu0 %v1269
    %v1271 = vpop.xlane.xlu0 %1270
    %v1272 = vsub.f32 %v1266, %v1271
    %v1273 = vmul.f32 %v1272, 1.442695
    %v1274 = vpow.pop %v1273
    %v1275 = vsel %vm226, %v1274, 0.0
    %1276 = vadd.xlane.f32.xlu0 %v1275
    %v1277 = vpop.xlane.xlu0 %1276
    %v1278 = vrcp.pop %v1277
    %v1279 = vmul.f32 %v1274, %v1278
    %1280 = vrot.lane.b32.xlu0 %v213, 64
    %v1281 = vpop.permute.xlu0 %1280
    %v1284 = vsel %vm226, %v1279, 0
    %1286 = vmatprep.subr.mxu0 0.0
    %1287 = vmatpush1.msra.mxu0 %v1281
    %1288 = vmatprep.subr.mxu0 0.0
    %1289 = vmatpush1.msra.mxu0 0.0
    %1290 = vmatprep.subr.mxu0 0.0
    %1291 = vmatpush1.msra.mxu0 0.0
    %1292 = vmatprep.subr.mxu0 0.0
    %1293 = vmatpush1.msra.mxu0 0.0
    %1294 = vmatprep.subr.mxu0 0.0
    %1295 = vmatpush1.msra.mxu0 0.0
    %1296 = vmatprep.subr.mxu0 0.0
    %1297 = vmatpush1.msra.mxu0 0.0
    %1298 = vmatprep.subr.mxu0 0.0
    %1299 = vmatpush1.msra.mxu0 0.0
    %1300 = vmatprep.subr.mxu0 0.0
    %1301 = vmatpush1.msra.mxu0 0.0
    %1302 = vmatprep.subr.mxu0 0.0
    %1303 = vmatpush1.msra.mxu0 0.0
    %1304 = vmatprep.subr.mxu0 0.0
    %1305 = vmatpush1.msra.mxu0 0.0
    %1306 = vmatprep.subr.mxu0 0.0
    %1307 = vmatpush1.msra.mxu0 0.0
    %1308 = vmatprep.subr.mxu0 0.0
    %1309 = vmatpush1.msra.mxu0 0.0
    %1310 = vmatprep.subr.mxu0 0.0
    %1311 = vmatpush1.msra.mxu0 0.0
    %1312 = vmatprep.subr.mxu0 0.0
    %1313 = vmatpush1.msra.mxu0 0.0
    %1314 = vmatprep.subr.mxu0 0.0
    %1315 = vmatpush1.msra.mxu0 0.0
    %1316 = vmatprep.subr.mxu0 0.0
    %1317 = vmatpush1.msra.mxu0 0.0
    %1318 = vmatprep.subr.mxu0 0.0
    %1319 = vmatpush1.msra.mxu0 0.0
    %1320 = vmatprep.subr.mxu0 0.0
    %1321 = vmatpush1.msra.mxu0 0.0
    %1322 = vmatprep.subr.mxu0 0.0
    %1323 = vmatpush1.msra.mxu0 0.0
    %1324 = vmatprep.subr.mxu0 0.0
    %1325 = vmatpush1.msra.mxu0 0.0
    %1326 = vmatprep.subr.mxu0 0.0
    %1327 = vmatpush1.msra.mxu0 0.0
    %1328 = vmatprep.subr.mxu0 0.0
    %1329 = vmatpush1.msra.mxu0 0.0
    %1330 = vmatprep.subr.mxu0 0.0
    %1331 = vmatpush1.msra.mxu0 0.0
    %1332 = vmatprep.subr.mxu0 0.0
    %1333 = vmatpush1.msra.mxu0 0.0
    %1334 = vmatprep.subr.mxu0 0.0
    %1335 = vmatpush1.msra.mxu0 0.0
    %1336 = vmatprep.subr.mxu0 0.0
    %1337 = vmatpush1.msra.mxu0 0.0
    %1338 = vmatprep.subr.mxu0 0.0
    %1339 = vmatpush1.msra.mxu0 0.0
    %1340 = vmatprep.subr.mxu0 0.0
    %1341 = vmatpush1.msra.mxu0 0.0
    %1342 = vmatprep.subr.mxu0 0.0
    %1343 = vmatpush1.msra.mxu0 0.0
    %1344 = vmatprep.subr.mxu0 0.0
    %1345 = vmatpush1.msra.mxu0 0.0
    %1346 = vmatprep.subr.mxu0 0.0
    %1347 = vmatpush1.msra.mxu0 0.0
    %1348 = vmatprep.subr.mxu0 0.0
    %1349 = vmatpush1.msra.mxu0 0.0
    %1350 = vmatprep.mubr.f32.mxu0 0.0
    %1351 = vmatmul.mubr.f32.gmra.mrb[0].mxu0 %v1284
    %v1352 = vpop.f32.mrb[0].mxu0
    %v1353 = vadd.f32 0.0, %v1352
    %v1354 = vpop.f32.mrb[0].mxu0
    %1355 = vdwg.mxu0
    %1356 = vrot.lane.b32.xlu0 %v213, 120
    %v1357 = vpop.permute.xlu0 %1356
    %1358 = vrot.lane.b32.xlu0 %v213, 88
    %v1359 = vpop.permute.xlu0 %1358
    %v1360 = vsel %vm226, %v1357, 0
    %v1362 = vsel %vm226, %v1359, 0
    %1364 = vmatprep.subr.mxu0 0.0
    %1365 = vmatpush1.xpose.msra.mxu0 %v1362
    %1366 = vmatprep.subr.mxu0 0.0
    %1367 = vmatpush1.xpose.msra.mxu0 0.0
    %1368 = vmatprep.subr.mxu0 0.0
    %1369 = vmatpush1.xpose.msra.mxu0 0.0
    %1370 = vmatprep.subr.mxu0 0.0
    %1371 = vmatpush1.xpose.msra.mxu0 0.0
    %1372 = vmatprep.subr.mxu0 0.0
    %1373 = vmatpush1.xpose.msra.mxu0 0.0
    %1374 = vmatprep.subr.mxu0 0.0
    %1375 = vmatpush1.xpose.msra.mxu0 0.0
    %1376 = vmatprep.subr.mxu0 0.0
    %1377 = vmatpush1.xpose.msra.mxu0 0.0
    %1378 = vmatprep.subr.mxu0 0.0
    %1379 = vmatpush1.xpose.msra.mxu0 0.0
    %1380 = vmatprep.subr.mxu0 0.0
    %1381 = vmatpush1.xpose.msra.mxu0 0.0
    %1382 = vmatprep.subr.mxu0 0.0
    %1383 = vmatpush1.xpose.msra.mxu0 0.0
    %1384 = vmatprep.subr.mxu0 0.0
    %1385 = vmatpush1.xpose.msra.mxu0 0.0
    %1386 = vmatprep.subr.mxu0 0.0
    %1387 = vmatpush1.xpose.msra.mxu0 0.0
    %1388 = vmatprep.subr.mxu0 0.0
    %1389 = vmatpush1.xpose.msra.mxu0 0.0
    %1390 = vmatprep.subr.mxu0 0.0
    %1391 = vmatpush1.xpose.msra.mxu0 0.0
    %1392 = vmatprep.subr.mxu0 0.0
    %1393 = vmatpush1.xpose.msra.mxu0 0.0
    %1394 = vmatprep.subr.mxu0 0.0
    %1395 = vmatpush1.xpose.msra.mxu0 0.0
    %1396 = vmatprep.subr.mxu0 0.0
    %1397 = vmatpush1.xpose.msra.mxu0 0.0
    %1398 = vmatprep.subr.mxu0 0.0
    %1399 = vmatpush1.xpose.msra.mxu0 0.0
    %1400 = vmatprep.subr.mxu0 0.0
    %1401 = vmatpush1.xpose.msra.mxu0 0.0
    %1402 = vmatprep.subr.mxu0 0.0
    %1403 = vmatpush1.xpose.msra.mxu0 0.0
    %1404 = vmatprep.subr.mxu0 0.0
    %1405 = vmatpush1.xpose.msra.mxu0 0.0
    %1406 = vmatprep.subr.mxu0 0.0
    %1407 = vmatpush1.xpose.msra.mxu0 0.0
    %1408 = vmatprep.subr.mxu0 0.0
    %1409 = vmatpush1.xpose.msra.mxu0 0.0
    %1410 = vmatprep.subr.mxu0 0.0
    %1411 = vmatpush1.xpose.msra.mxu0 0.0
    %1412 = vmatprep.subr.mxu0 0.0
    %1413 = vmatpush1.xpose.msra.mxu0 0.0
    %1414 = vmatprep.subr.mxu0 0.0
    %1415 = vmatpush1.xpose.msra.mxu0 0.0
    %1416 = vmatprep.subr.mxu0 0.0
    %1417 = vmatpush1.xpose.msra.mxu0 0.0
    %1418 = vmatprep.subr.mxu0 0.0
    %1419 = vmatpush1.xpose.msra.mxu0 0.0
    %1420 = vmatprep.subr.mxu0 0.0
    %1421 = vmatpush1.xpose.msra.mxu0 0.0
    %1422 = vmatprep.subr.mxu0 0.0
    %1423 = vmatpush1.xpose.msra.mxu0 0.0
    %1424 = vmatprep.subr.mxu0 0.0
    %1425 = vmatpush1.xpose.msra.mxu0 0.0
    %1426 = vmatprep.subr.mxu0 0.0
    %1427 = vmatpush1.xpose.msra.mxu0 0.0
    %1428 = vmatprep.mubr.f32.mxu0 0.0
    %1429 = vmatmul.mubr.f32.gmra.mrb[0].mxu0 %v1360
    %v1430 = vpop.f32.mrb[0].mxu0
    %v1431 = vadd.f32 %v1190, %v1430
    %v1432 = vpop.f32.mrb[0].mxu0
    %1433 = vdwg.mxu0
    %v1434 = vsel %vm226, %v1431, -inf
    %1435 = vmax.xlane.f32.xlu0 %v1434
    %v1436 = vpop.xlane.xlu0 %1435
    %v1437 = vsub.f32 %v1431, %v1436
    %v1438 = vmul.f32 %v1437, 1.442695
    %v1439 = vpow.pop %v1438
    %v1440 = vsel %vm226, %v1439, 0.0
    %1441 = vadd.xlane.f32.xlu0 %v1440
    %v1442 = vpop.xlane.xlu0 %1441
    %v1443 = vrcp.pop %v1442
    %v1444 = vmul.f32 %v1439, %v1443
    %1445 = vrot.lane.b32.xlu0 %v213, 56
    %v1446 = vpop.permute.xlu0 %1445
    %v1449 = vsel %vm226, %v1444, 0
    %1451 = vmatprep.subr.mxu0 0.0
    %1452 = vmatpush1.msra.mxu0 %v1446
    %1453 = vmatprep.subr.mxu0 0.0
    %1454 = vmatpush1.msra.mxu0 0.0
    %1455 = vmatprep.subr.mxu0 0.0
    %1456 = vmatpush1.msra.mxu0 0.0
    %1457 = vmatprep.subr.mxu0 0.0
    %1458 = vmatpush1.msra.mxu0 0.0
    %1459 = vmatprep.subr.mxu0 0.0
    %1460 = vmatpush1.msra.mxu0 0.0
    %1461 = vmatprep.subr.mxu0 0.0
    %1462 = vmatpush1.msra.mxu0 0.0
    %1463 = vmatprep.subr.mxu0 0.0
    %1464 = vmatpush1.msra.mxu0 0.0
    %1465 = vmatprep.subr.mxu0 0.0
    %1466 = vmatpush1.msra.mxu0 0.0
    %1467 = vmatprep.subr.mxu0 0.0
    %1468 = vmatpush1.msra.mxu0 0.0
    %1469 = vmatprep.subr.mxu0 0.0
    %1470 = vmatpush1.msra.mxu0 0.0
    %1471 = vmatprep.subr.mxu0 0.0
    %1472 = vmatpush1.msra.mxu0 0.0
    %1473 = vmatprep.subr.mxu0 0.0
    %1474 = vmatpush1.msra.mxu0 0.0
    %1475 = vmatprep.subr.mxu0 0.0
    %1476 = vmatpush1.msra.mxu0 0.0
    %1477 = vmatprep.subr.mxu0 0.0
    %1478 = vmatpush1.msra.mxu0 0.0
    %1479 = vmatprep.subr.mxu0 0.0
    %1480 = vmatpush1.msra.mxu0 0.0
    %1481 = vmatprep.subr.mxu0 0.0
    %1482 = vmatpush1.msra.mxu0 0.0
    %1483 = vmatprep.subr.mxu0 0.0
    %1484 = vmatpush1.msra.mxu0 0.0
    %1485 = vmatprep.subr.mxu0 0.0
    %1486 = vmatpush1.msra.mxu0 0.0
    %1487 = vmatprep.subr.mxu0 0.0
    %1488 = vmatpush1.msra.mxu0 0.0
    %1489 = vmatprep.subr.mxu0 0.0
    %1490 = vmatpush1.msra.mxu0 0.0
    %1491 = vmatprep.subr.mxu0 0.0
    %1492 = vmatpush1.msra.mxu0 0.0
    %1493 = vmatprep.subr.mxu0 0.0
    %1494 = vmatpush1.msra.mxu0 0.0
    %1495 = vmatprep.subr.mxu0 0.0
    %1496 = vmatpush1.msra.mxu0 0.0
    %1497 = vmatprep.subr.mxu0 0.0
    %1498 = vmatpush1.msra.mxu0 0.0
    %1499 = vmatprep.subr.mxu0 0.0
    %1500 = vmatpush1.msra.mxu0 0.0
    %1501 = vmatprep.subr.mxu0 0.0
    %1502 = vmatpush1.msra.mxu0 0.0
    %1503 = vmatprep.subr.mxu0 0.0
    %1504 = vmatpush1.msra.mxu0 0.0
    %1505 = vmatprep.subr.mxu0 0.0
    %1506 = vmatpush1.msra.mxu0 0.0
    %1507 = vmatprep.subr.mxu0 0.0
    %1508 = vmatpush1.msra.mxu0 0.0
    %1509 = vmatprep.subr.mxu0 0.0
    %1510 = vmatpush1.msra.mxu0 0.0
    %1511 = vmatprep.subr.mxu0 0.0
    %1512 = vmatpush1.msra.mxu0 0.0
    %1513 = vmatprep.subr.mxu0 0.0
    %1514 = vmatpush1.msra.mxu0 0.0
    %1515 = vmatprep.mubr.f32.mxu0 0.0
    %1516 = vmatmul.mubr.f32.gmra.mrb[0].mxu0 %v1449
    %v1517 = vpop.f32.mrb[0].mxu0
    %v1518 = vadd.f32 0.0, %v1517
    %v1519 = vpop.f32.mrb[0].mxu0
    %1520 = vdwg.mxu0
    %v1522 = vsel %vm226, %v1518, 0
    %1524 = vmatprep.subr.mxu0 0.0
    %1525 = vmatpush1.msra.mxu0 %v555
    %1526 = vmatprep.subr.mxu0 0.0
    %1527 = vmatpush1.msra.mxu0 0.0
    %1528 = vmatprep.subr.mxu0 0.0
    %1529 = vmatpush1.msra.mxu0 0.0
    %1530 = vmatprep.subr.mxu0 0.0
    %1531 = vmatpush1.msra.mxu0 0.0
    %1532 = vmatprep.subr.mxu0 0.0
    %1533 = vmatpush1.msra.mxu0 0.0
    %1534 = vmatprep.subr.mxu0 0.0
    %1535 = vmatpush1.msra.mxu0 0.0
    %1536 = vmatprep.subr.mxu0 0.0
    %1537 = vmatpush1.msra.mxu0 0.0
    %1538 = vmatprep.subr.mxu0 0.0
    %1539 = vmatpush1.msra.mxu0 0.0
    %1540 = vmatprep.subr.mxu0 0.0
    %1541 = vmatpush1.msra.mxu0 0.0
    %1542 = vmatprep.subr.mxu0 0.0
    %1543 = vmatpush1.msra.mxu0 0.0
    %1544 = vmatprep.subr.mxu0 0.0
    %1545 = vmatpush1.msra.mxu0 0.0
    %1546 = vmatprep.subr.mxu0 0.0
    %1547 = vmatpush1.msra.mxu0 0.0
    %1548 = vmatprep.subr.mxu0 0.0
    %1549 = vmatpush1.msra.mxu0 0.0
    %1550 = vmatprep.subr.mxu0 0.0
    %1551 = vmatpush1.msra.mxu0 0.0
    %1552 = vmatprep.subr.mxu0 0.0
    %1553 = vmatpush1.msra.mxu0 0.0
    %1554 = vmatprep.subr.mxu0 0.0
    %1555 = vmatpush1.msra.mxu0 0.0
    %1556 = vmatprep.subr.mxu0 0.0
    %1557 = vmatpush1.msra.mxu0 0.0
    %1558 = vmatprep.subr.mxu0 0.0
    %1559 = vmatpush1.msra.mxu0 0.0
    %1560 = vmatprep.subr.mxu0 0.0
    %1561 = vmatpush1.msra.mxu0 0.0
    %1562 = vmatprep.subr.mxu0 0.0
    %1563 = vmatpush1.msra.mxu0 0.0
    %1564 = vmatprep.subr.mxu0 0.0
    %1565 = vmatpush1.msra.mxu0 0.0
    %1566 = vmatprep.subr.mxu0 0.0
    %1567 = vmatpush1.msra.mxu0 0.0
    %1568 = vmatprep.subr.mxu0 0.0
    %1569 = vmatpush1.msra.mxu0 0.0
    %1570 = vmatprep.subr.mxu0 0.0
    %1571 = vmatpush1.msra.mxu0 0.0
    %1572 = vmatprep.subr.mxu0 0.0
    %1573 = vmatpush1.msra.mxu0 0.0
    %1574 = vmatprep.subr.mxu0 0.0
    %1575 = vmatpush1.msra.mxu0 0.0
    %1576 = vmatprep.subr.mxu0 0.0
    %1577 = vmatpush1.msra.mxu0 0.0
    %1578 = vmatprep.subr.mxu0 0.0
    %1579 = vmatpush1.msra.mxu0 0.0
    %1580 = vmatprep.subr.mxu0 0.0
    %1581 = vmatpush1.msra.mxu0 0.0
    %1582 = vmatprep.subr.mxu0 0.0
    %1583 = vmatpush1.msra.mxu0 0.0
    %1584 = vmatprep.subr.mxu0 0.0
    %1585 = vmatpush1.msra.mxu0 0.0
    %1586 = vmatprep.subr.mxu0 0.0
    %1587 = vmatpush1.msra.mxu0 0.0
    %1588 = vmatprep.mubr.f32.mxu0 0.0
    %1589 = vmatmul.mubr.f32.gmra.mrb[0].mxu0 %v1522
    %v1590 = vpop.f32.mrb[0].mxu0
    %v1591 = vadd.f32 0.0, %v1590
    %v1592 = vpop.f32.mrb[0].mxu0
    %1593 = vdwg.mxu0
    %v1595 = vsel %vm226, %v1353, 0
    %1597 = vmatprep.subr.mxu0 0.0
    %1598 = vmatpush1.msra.mxu0 %v388
    %1599 = vmatprep.subr.mxu0 0.0
    %1600 = vmatpush1.msra.mxu0 0.0
    %1601 = vmatprep.subr.mxu0 0.0
    %1602 = vmatpush1.msra.mxu0 0.0
    %1603 = vmatprep.subr.mxu0 0.0
    %1604 = vmatpush1.msra.mxu0 0.0
    %1605 = vmatprep.subr.mxu0 0.0
    %1606 = vmatpush1.msra.mxu0 0.0
    %1607 = vmatprep.subr.mxu0 0.0
    %1608 = vmatpush1.msra.mxu0 0.0
    %1609 = vmatprep.subr.mxu0 0.0
    %1610 = vmatpush1.msra.mxu0 0.0
    %1611 = vmatprep.subr.mxu0 0.0
    %1612 = vmatpush1.msra.mxu0 0.0
    %1613 = vmatprep.subr.mxu0 0.0
    %1614 = vmatpush1.msra.mxu0 0.0
    %1615 = vmatprep.subr.mxu0 0.0
    %1616 = vmatpush1.msra.mxu0 0.0
    %1617 = vmatprep.subr.mxu0 0.0
    %1618 = vmatpush1.msra.mxu0 0.0
    %1619 = vmatprep.subr.mxu0 0.0
    %1620 = vmatpush1.msra.mxu0 0.0
    %1621 = vmatprep.subr.mxu0 0.0
    %1622 = vmatpush1.msra.mxu0 0.0
    %1623 = vmatprep.subr.mxu0 0.0
    %1624 = vmatpush1.msra.mxu0 0.0
    %1625 = vmatprep.subr.mxu0 0.0
    %1626 = vmatpush1.msra.mxu0 0.0
    %1627 = vmatprep.subr.mxu0 0.0
    %1628 = vmatpush1.msra.mxu0 0.0
    %1629 = vmatprep.subr.mxu0 0.0
    %1630 = vmatpush1.msra.mxu0 0.0
    %1631 = vmatprep.subr.mxu0 0.0
    %1632 = vmatpush1.msra.mxu0 0.0
    %1633 = vmatprep.subr.mxu0 0.0
    %1634 = vmatpush1.msra.mxu0 0.0
    %1635 = vmatprep.subr.mxu0 0.0
    %1636 = vmatpush1.msra.mxu0 0.0
    %1637 = vmatprep.subr.mxu0 0.0
    %1638 = vmatpush1.msra.mxu0 0.0
    %1639 = vmatprep.subr.mxu0 0.0
    %1640 = vmatpush1.msra.mxu0 0.0
    %1641 = vmatprep.subr.mxu0 0.0
    %1642 = vmatpush1.msra.mxu0 0.0
    %1643 = vmatprep.subr.mxu0 0.0
    %1644 = vmatpush1.msra.mxu0 0.0
    %1645 = vmatprep.subr.mxu0 0.0
    %1646 = vmatpush1.msra.mxu0 0.0
    %1647 = vmatprep.subr.mxu0 0.0
    %1648 = vmatpush1.msra.mxu0 0.0
    %1649 = vmatprep.subr.mxu0 0.0
    %1650 = vmatpush1.msra.mxu0 0.0
    %1651 = vmatprep.subr.mxu0 0.0
    %1652 = vmatpush1.msra.mxu0 0.0
    %1653 = vmatprep.subr.mxu0 0.0
    %1654 = vmatpush1.msra.mxu0 0.0
    %1655 = vmatprep.subr.mxu0 0.0
    %1656 = vmatpush1.msra.mxu0 0.0
    %1657 = vmatprep.subr.mxu0 0.0
    %1658 = vmatpush1.msra.mxu0 0.0
    %1659 = vmatprep.subr.mxu0 0.0
    %1660 = vmatpush1.msra.mxu0 0.0
    %1661 = vmatprep.mubr.f32.mxu0 0.0
    %1662 = vmatmul.mubr.f32.gmra.mrb[0].mxu0 %v1595
    %v1663 = vpop.f32.mrb[0].mxu0
    %v1664 = vadd.f32 %v1591, %v1663
    %v1665 = vpop.f32.mrb[0].mxu0
    %1666 = vdwg.mxu0
    %1667 = vrot.lane.b32.xlu0 %v213, 112
    %v1668 = vpop.permute.xlu0 %1667
    %1669 = vrot.lane.b32.xlu0 %v213, 80
    %v1670 = vpop.permute.xlu0 %1669
    %v1671 = vsel %vm226, %v1668, 0
    %v1673 = vsel %vm226, %v1670, 0
    %1675 = vmatprep.subr.mxu0 0.0
    %1676 = vmatpush1.xpose.msra.mxu0 %v1673
    %1677 = vmatprep.subr.mxu0 0.0
    %1678 = vmatpush1.xpose.msra.mxu0 0.0
    %1679 = vmatprep.subr.mxu0 0.0
    %1680 = vmatpush1.xpose.msra.mxu0 0.0
    %1681 = vmatprep.subr.mxu0 0.0
    %1682 = vmatpush1.xpose.msra.mxu0 0.0
    %1683 = vmatprep.subr.mxu0 0.0
    %1684 = vmatpush1.xpose.msra.mxu0 0.0
    %1685 = vmatprep.subr.mxu0 0.0
    %1686 = vmatpush1.xpose.msra.mxu0 0.0
    %1687 = vmatprep.subr.mxu0 0.0
    %1688 = vmatpush1.xpose.msra.mxu0 0.0
    %1689 = vmatprep.subr.mxu0 0.0
    %1690 = vmatpush1.xpose.msra.mxu0 0.0
    %1691 = vmatprep.subr.mxu0 0.0
    %1692 = vmatpush1.xpose.msra.mxu0 0.0
    %1693 = vmatprep.subr.mxu0 0.0
    %1694 = vmatpush1.xpose.msra.mxu0 0.0
    %1695 = vmatprep.subr.mxu0 0.0
    %1696 = vmatpush1.xpose.msra.mxu0 0.0
    %1697 = vmatprep.subr.mxu0 0.0
    %1698 = vmatpush1.xpose.msra.mxu0 0.0
    %1699 = vmatprep.subr.mxu0 0.0
    %1700 = vmatpush1.xpose.msra.mxu0 0.0
    %1701 = vmatprep.subr.mxu0 0.0
    %1702 = vmatpush1.xpose.msra.mxu0 0.0
    %1703 = vmatprep.subr.mxu0 0.0
    %1704 = vmatpush1.xpose.msra.mxu0 0.0
    %1705 = vmatprep.subr.mxu0 0.0
    %1706 = vmatpush1.xpose.msra.mxu0 0.0
    %1707 = vmatprep.subr.mxu0 0.0
    %1708 = vmatpush1.xpose.msra.mxu0 0.0
    %1709 = vmatprep.subr.mxu0 0.0
    %1710 = vmatpush1.xpose.msra.mxu0 0.0
    %1711 = vmatprep.subr.mxu0 0.0
    %1712 = vmatpush1.xpose.msra.mxu0 0.0
    %1713 = vmatprep.subr.mxu0 0.0
    %1714 = vmatpush1.xpose.msra.mxu0 0.0
    %1715 = vmatprep.subr.mxu0 0.0
    %1716 = vmatpush1.xpose.msra.mxu0 0.0
    %1717 = vmatprep.subr.mxu0 0.0
    %1718 = vmatpush1.xpose.msra.mxu0 0.0
    %1719 = vmatprep.subr.mxu0 0.0
    %1720 = vmatpush1.xpose.msra.mxu0 0.0
    %1721 = vmatprep.subr.mxu0 0.0
    %1722 = vmatpush1.xpose.msra.mxu0 0.0
    %1723 = vmatprep.subr.mxu0 0.0
    %1724 = vmatpush1.xpose.msra.mxu0 0.0
    %1725 = vmatprep.subr.mxu0 0.0
    %1726 = vmatpush1.xpose.msra.mxu0 0.0
    %1727 = vmatprep.subr.mxu0 0.0
    %1728 = vmatpush1.xpose.msra.mxu0 0.0
    %1729 = vmatprep.subr.mxu0 0.0
    %1730 = vmatpush1.xpose.msra.mxu0 0.0
    %1731 = vmatprep.subr.mxu0 0.0
    %1732 = vmatpush1.xpose.msra.mxu0 0.0
    %1733 = vmatprep.subr.mxu0 0.0
    %1734 = vmatpush1.xpose.msra.mxu0 0.0
    %1735 = vmatprep.subr.mxu0 0.0
    %1736 = vmatpush1.xpose.msra.mxu0 0.0
    %1737 = vmatprep.subr.mxu0 0.0
    %1738 = vmatpush1.xpose.msra.mxu0 0.0
    %1739 = vmatprep.mubr.f32.mxu0 0.0
    %1740 = vmatmul.mubr.f32.gmra.mrb[0].mxu0 %v1671
    %v1741 = vpop.f32.mrb[0].mxu0
    %v1742 = vadd.f32 %v1190, %v1741
    %v1743 = vpop.f32.mrb[0].mxu0
    %1744 = vdwg.mxu0
    %v1745 = vsel %vm226, %v1742, -inf
    %1746 = vmax.xlane.f32.xlu0 %v1745
    %v1747 = vpop.xlane.xlu0 %1746
    %v1748 = vsub.f32 %v1742, %v1747
    %v1749 = vmul.f32 %v1748, 1.442695
    %v1750 = vpow.pop %v1749
    %v1751 = vsel %vm226, %v1750, 0.0
    %1752 = vadd.xlane.f32.xlu0 %v1751
    %v1753 = vpop.xlane.xlu0 %1752
    %v1754 = vrcp.pop %v1753
    %v1755 = vmul.f32 %v1750, %v1754
    %1756 = vrot.lane.b32.xlu0 %v213, 48
    %v1757 = vpop.permute.xlu0 %1756
    %v1760 = vsel %vm226, %v1755, 0
    %1762 = vmatprep.subr.mxu0 0.0
    %1763 = vmatpush1.msra.mxu0 %v1757
    %1764 = vmatprep.subr.mxu0 0.0
    %1765 = vmatpush1.msra.mxu0 0.0
    %1766 = vmatprep.subr.mxu0 0.0
    %1767 = vmatpush1.msra.mxu0 0.0
    %1768 = vmatprep.subr.mxu0 0.0
    %1769 = vmatpush1.msra.mxu0 0.0
    %1770 = vmatprep.subr.mxu0 0.0
    %1771 = vmatpush1.msra.mxu0 0.0
    %1772 = vmatprep.subr.mxu0 0.0
    %1773 = vmatpush1.msra.mxu0 0.0
    %1774 = vmatprep.subr.mxu0 0.0
    %1775 = vmatpush1.msra.mxu0 0.0
    %1776 = vmatprep.subr.mxu0 0.0
    %1777 = vmatpush1.msra.mxu0 0.0
    %1778 = vmatprep.subr.mxu0 0.0
    %1779 = vmatpush1.msra.mxu0 0.0
    %1780 = vmatprep.subr.mxu0 0.0
    %1781 = vmatpush1.msra.mxu0 0.0
    %1782 = vmatprep.subr.mxu0 0.0
    %1783 = vmatpush1.msra.mxu0 0.0
    %1784 = vmatprep.subr.mxu0 0.0
    %1785 = vmatpush1.msra.mxu0 0.0
    %1786 = vmatprep.subr.mxu0 0.0
    %1787 = vmatpush1.msra.mxu0 0.0
    %1788 = vmatprep.subr.mxu0 0.0
    %1789 = vmatpush1.msra.mxu0 0.0
    %1790 = vmatprep.subr.mxu0 0.0
    %1791 = vmatpush1.msra.mxu0 0.0
    %1792 = vmatprep.subr.mxu0 0.0
    %1793 = vmatpush1.msra.mxu0 0.0
    %1794 = vmatprep.subr.mxu0 0.0
    %1795 = vmatpush1.msra.mxu0 0.0
    %1796 = vmatprep.subr.mxu0 0.0
    %1797 = vmatpush1.msra.mxu0 0.0
    %1798 = vmatprep.subr.mxu0 0.0
    %1799 = vmatpush1.msra.mxu0 0.0
    %1800 = vmatprep.subr.mxu0 0.0
    %1801 = vmatpush1.msra.mxu0 0.0
    %1802 = vmatprep.subr.mxu0 0.0
    %1803 = vmatpush1.msra.mxu0 0.0
    %1804 = vmatprep.subr.mxu0 0.0
    %1805 = vmatpush1.msra.mxu0 0.0
    %1806 = vmatprep.subr.mxu0 0.0
    %1807 = vmatpush1.msra.mxu0 0.0
    %1808 = vmatprep.subr.mxu0 0.0
    %1809 = vmatpush1.msra.mxu0 0.0
    %1810 = vmatprep.subr.mxu0 0.0
    %1811 = vmatpush1.msra.mxu0 0.0
    %1812 = vmatprep.subr.mxu0 0.0
    %1813 = vmatpush1.msra.mxu0 0.0
    %1814 = vmatprep.subr.mxu0 0.0
    %1815 = vmatpush1.msra.mxu0 0.0
    %1816 = vmatprep.subr.mxu0 0.0
    %1817 = vmatpush1.msra.mxu0 0.0
    %1818 = vmatprep.subr.mxu0 0.0
    %1819 = vmatpush1.msra.mxu0 0.0
    %1820 = vmatprep.subr.mxu0 0.0
    %1821 = vmatpush1.msra.mxu0 0.0
    %1822 = vmatprep.subr.mxu0 0.0
    %1823 = vmatpush1.msra.mxu0 0.0
    %1824 = vmatprep.subr.mxu0 0.0
    %1825 = vmatpush1.msra.mxu0 0.0
    %1826 = vmatprep.mubr.f32.mxu0 0.0
    %1827 = vmatmul.mubr.f32.gmra.mrb[0].mxu0 %v1760
    %v1828 = vpop.f32.mrb[0].mxu0
    %v1829 = vadd.f32 0.0, %v1828
    %v1830 = vpop.f32.mrb[0].mxu0
    %1831 = vdwg.mxu0
    %v1833 = vsel %vm226, %v1829, 0
    %1835 = vmatprep.subr.mxu0 0.0
    %1836 = vmatpush1.msra.mxu0 %v868
    %1837 = vmatprep.subr.mxu0 0.0
    %1838 = vmatpush1.msra.mxu0 0.0
    %1839 = vmatprep.subr.mxu0 0.0
    %1840 = vmatpush1.msra.mxu0 0.0
    %1841 = vmatprep.subr.mxu0 0.0
    %1842 = vmatpush1.msra.mxu0 0.0
    %1843 = vmatprep.subr.mxu0 0.0
    %1844 = vmatpush1.msra.mxu0 0.0
    %1845 = vmatprep.subr.mxu0 0.0
    %1846 = vmatpush1.msra.mxu0 0.0
    %1847 = vmatprep.subr.mxu0 0.0
    %1848 = vmatpush1.msra.mxu0 0.0
    %1849 = vmatprep.subr.mxu0 0.0
    %1850 = vmatpush1.msra.mxu0 0.0
    %1851 = vmatprep.subr.mxu0 0.0
    %1852 = vmatpush1.msra.mxu0 0.0
    %1853 = vmatprep.subr.mxu0 0.0
    %1854 = vmatpush1.msra.mxu0 0.0
    %1855 = vmatprep.subr.mxu0 0.0
    %1856 = vmatpush1.msra.mxu0 0.0
    %1857 = vmatprep.subr.mxu0 0.0
    %1858 = vmatpush1.msra.mxu0 0.0
    %1859 = vmatprep.subr.mxu0 0.0
    %1860 = vmatpush1.msra.mxu0 0.0
    %1861 = vmatprep.subr.mxu0 0.0
    %1862 = vmatpush1.msra.mxu0 0.0
    %1863 = vmatprep.subr.mxu0 0.0
    %1864 = vmatpush1.msra.mxu0 0.0
    %1865 = vmatprep.subr.mxu0 0.0
    %1866 = vmatpush1.msra.mxu0 0.0
    %1867 = vmatprep.subr.mxu0 0.0
    %1868 = vmatpush1.msra.mxu0 0.0
    %1869 = vmatprep.subr.mxu0 0.0
    %1870 = vmatpush1.msra.mxu0 0.0
    %1871 = vmatprep.subr.mxu0 0.0
    %1872 = vmatpush1.msra.mxu0 0.0
    %1873 = vmatprep.subr.mxu0 0.0
    %1874 = vmatpush1.msra.mxu0 0.0
    %1875 = vmatprep.subr.mxu0 0.0
    %1876 = vmatpush1.msra.mxu0 0.0
    %1877 = vmatprep.subr.mxu0 0.0
    %1878 = vmatpush1.msra.mxu0 0.0
    %1879 = vmatprep.subr.mxu0 0.0
    %1880 = vmatpush1.msra.mxu0 0.0
    %1881 = vmatprep.subr.mxu0 0.0
    %1882 = vmatpush1.msra.mxu0 0.0
    %1883 = vmatprep.subr.mxu0 0.0
    %1884 = vmatpush1.msra.mxu0 0.0
    %1885 = vmatprep.subr.mxu0 0.0
    %1886 = vmatpush1.msra.mxu0 0.0
    %1887 = vmatprep.subr.mxu0 0.0
    %1888 = vmatpush1.msra.mxu0 0.0
    %1889 = vmatprep.subr.mxu0 0.0
    %1890 = vmatpush1.msra.mxu0 0.0
    %1891 = vmatprep.subr.mxu0 0.0
    %1892 = vmatpush1.msra.mxu0 0.0
    %1893 = vmatprep.subr.mxu0 0.0
    %1894 = vmatpush1.msra.mxu0 0.0
    %1895 = vmatprep.subr.mxu0 0.0
    %1896 = vmatpush1.msra.mxu0 0.0
    %1897 = vmatprep.subr.mxu0 0.0
    %1898 = vmatpush1.msra.mxu0 0.0
    %1899 = vmatprep.mubr.f32.mxu0 0.0
    %1900 = vmatmul.mubr.f32.gmra.mrb[0].mxu0 %v1833
    %v1901 = vpop.f32.mrb[0].mxu0
    %v1902 = vadd.f32 0.0, %v1901
    %v1903 = vpop.f32.mrb[0].mxu0
    %1904 = vdwg.mxu0
    %v1905 = vadd.f32 %v1664, %v1902
    %1906 = vrot.lane.b32.xlu0 %v213, 104
    %v1907 = vpop.permute.xlu0 %1906
    %1908 = vrot.lane.b32.xlu0 %v213, 72
    %v1909 = vpop.permute.xlu0 %1908
    %v1910 = vsel %vm226, %v1907, 0
    %v1912 = vsel %vm226, %v1909, 0
    %1914 = vmatprep.subr.mxu0 0.0
    %1915 = vmatpush1.xpose.msra.mxu0 %v1912
    %1916 = vmatprep.subr.mxu0 0.0
    %1917 = vmatpush1.xpose.msra.mxu0 0.0
    %1918 = vmatprep.subr.mxu0 0.0
    %1919 = vmatpush1.xpose.msra.mxu0 0.0
    %1920 = vmatprep.subr.mxu0 0.0
    %1921 = vmatpush1.xpose.msra.mxu0 0.0
    %1922 = vmatprep.subr.mxu0 0.0
    %1923 = vmatpush1.xpose.msra.mxu0 0.0
    %1924 = vmatprep.subr.mxu0 0.0
    %1925 = vmatpush1.xpose.msra.mxu0 0.0
    %1926 = vmatprep.subr.mxu0 0.0
    %1927 = vmatpush1.xpose.msra.mxu0 0.0
    %1928 = vmatprep.subr.mxu0 0.0
    %1929 = vmatpush1.xpose.msra.mxu0 0.0
    %1930 = vmatprep.subr.mxu0 0.0
    %1931 = vmatpush1.xpose.msra.mxu0 0.0
    %1932 = vmatprep.subr.mxu0 0.0
    %1933 = vmatpush1.xpose.msra.mxu0 0.0
    %1934 = vmatprep.subr.mxu0 0.0
    %1935 = vmatpush1.xpose.msra.mxu0 0.0
    %1936 = vmatprep.subr.mxu0 0.0
    %1937 = vmatpush1.xpose.msra.mxu0 0.0
    %1938 = vmatprep.subr.mxu0 0.0
    %1939 = vmatpush1.xpose.msra.mxu0 0.0
    %1940 = vmatprep.subr.mxu0 0.0
    %1941 = vmatpush1.xpose.msra.mxu0 0.0
    %1942 = vmatprep.subr.mxu0 0.0
    %1943 = vmatpush1.xpose.msra.mxu0 0.0
    %1944 = vmatprep.subr.mxu0 0.0
    %1945 = vmatpush1.xpose.msra.mxu0 0.0
    %1946 = vmatprep.subr.mxu0 0.0
    %1947 = vmatpush1.xpose.msra.mxu0 0.0
    %1948 = vmatprep.subr.mxu0 0.0
    %1949 = vmatpush1.xpose.msra.mxu0 0.0
    %1950 = vmatprep.subr.mxu0 0.0
    %1951 = vmatpush1.xpose.msra.mxu0 0.0
    %1952 = vmatprep.subr.mxu0 0.0
    %1953 = vmatpush1.xpose.msra.mxu0 0.0
    %1954 = vmatprep.subr.mxu0 0.0
    %1955 = vmatpush1.xpose.msra.mxu0 0.0
    %1956 = vmatprep.subr.mxu0 0.0
    %1957 = vmatpush1.xpose.msra.mxu0 0.0
    %1958 = vmatprep.subr.mxu0 0.0
    %1959 = vmatpush1.xpose.msra.mxu0 0.0
    %1960 = vmatprep.subr.mxu0 0.0
    %1961 = vmatpush1.xpose.msra.mxu0 0.0
    %1962 = vmatprep.subr.mxu0 0.0
    %1963 = vmatpush1.xpose.msra.mxu0 0.0
    %1964 = vmatprep.subr.mxu0 0.0
    %1965 = vmatpush1.xpose.msra.mxu0 0.0
    %1966 = vmatprep.subr.mxu0 0.0
    %1967 = vmatpush1.xpose.msra.mxu0 0.0
    %1968 = vmatprep.subr.mxu0 0.0
    %1969 = vmatpush1.xpose.msra.mxu0 0.0
    %1970 = vmatprep.subr.mxu0 0.0
    %1971 = vmatpush1.xpose.msra.mxu0 0.0
    %1972 = vmatprep.subr.mxu0 0.0
    %1973 = vmatpush1.xpose.msra.mxu0 0.0
    %1974 = vmatprep.subr.mxu0 0.0
    %1975 = vmatpush1.xpose.msra.mxu0 0.0
    %1976 = vmatprep.subr.mxu0 0.0
    %1977 = vmatpush1.xpose.msra.mxu0 0.0
    %1978 = vmatprep.mubr.f32.mxu0 0.0
    %1979 = vmatmul.mubr.f32.gmra.mrb[0].mxu0 %v1910
    %v1980 = vpop.f32.mrb[0].mxu0
    %v1981 = vadd.f32 %v1190, %v1980
    %v1982 = vpop.f32.mrb[0].mxu0
    %1983 = vdwg.mxu0
    %v1984 = vsel %vm226, %v1981, -inf
    %1985 = vmax.xlane.f32.xlu0 %v1984
    %v1986 = vpop.xlane.xlu0 %1985
    %v1987 = vsub.f32 %v1981, %v1986
    %v1988 = vmul.f32 %v1987, 1.442695
    %v1989 = vpow.pop %v1988
    %v1990 = vsel %vm226, %v1989, 0.0
    %1991 = vadd.xlane.f32.xlu0 %v1990
    %v1992 = vpop.xlane.xlu0 %1991
    %v1993 = vrcp.pop %v1992
    %v1994 = vmul.f32 %v1989, %v1993
    %1995 = vrot.lane.b32.xlu0 %v213, 40
    %v1996 = vpop.permute.xlu0 %1995
    %v1999 = vsel %vm226, %v1994, 0
    %2001 = vmatprep.subr.mxu0 0.0
    %2002 = vmatpush1.msra.mxu0 %v1996
    %2003 = vmatprep.subr.mxu0 0.0
    %2004 = vmatpush1.msra.mxu0 0.0
    %2005 = vmatprep.subr.mxu0 0.0
    %2006 = vmatpush1.msra.mxu0 0.0
    %2007 = vmatprep.subr.mxu0 0.0
    %2008 = vmatpush1.msra.mxu0 0.0
    %2009 = vmatprep.subr.mxu0 0.0
    %2010 = vmatpush1.msra.mxu0 0.0
    %2011 = vmatprep.subr.mxu0 0.0
    %2012 = vmatpush1.msra.mxu0 0.0
    %2013 = vmatprep.subr.mxu0 0.0
    %2014 = vmatpush1.msra.mxu0 0.0
    %2015 = vmatprep.subr.mxu0 0.0
    %2016 = vmatpush1.msra.mxu0 0.0
    %2017 = vmatprep.subr.mxu0 0.0
    %2018 = vmatpush1.msra.mxu0 0.0
    %2019 = vmatprep.subr.mxu0 0.0
    %2020 = vmatpush1.msra.mxu0 0.0
    %2021 = vmatprep.subr.mxu0 0.0
    %2022 = vmatpush1.msra.mxu0 0.0
    %2023 = vmatprep.subr.mxu0 0.0
    %2024 = vmatpush1.msra.mxu0 0.0
    %2025 = vmatprep.subr.mxu0 0.0
    %2026 = vmatpush1.msra.mxu0 0.0
    %2027 = vmatprep.subr.mxu0 0.0
    %2028 = vmatpush1.msra.mxu0 0.0
    %2029 = vmatprep.subr.mxu0 0.0
    %2030 = vmatpush1.msra.mxu0 0.0
    %2031 = vmatprep.subr.mxu0 0.0
    %2032 = vmatpush1.msra.mxu0 0.0
    %2033 = vmatprep.subr.mxu0 0.0
    %2034 = vmatpush1.msra.mxu0 0.0
    %2035 = vmatprep.subr.mxu0 0.0
    %2036 = vmatpush1.msra.mxu0 0.0
    %2037 = vmatprep.subr.mxu0 0.0
    %2038 = vmatpush1.msra.mxu0 0.0
    %2039 = vmatprep.subr.mxu0 0.0
    %2040 = vmatpush1.msra.mxu0 0.0
    %2041 = vmatprep.subr.mxu0 0.0
    %2042 = vmatpush1.msra.mxu0 0.0
    %2043 = vmatprep.subr.mxu0 0.0
    %2044 = vmatpush1.msra.mxu0 0.0
    %2045 = vmatprep.subr.mxu0 0.0
    %2046 = vmatpush1.msra.mxu0 0.0
    %2047 = vmatprep.subr.mxu0 0.0
    %2048 = vmatpush1.msra.mxu0 0.0
    %2049 = vmatprep.subr.mxu0 0.0
    %2050 = vmatpush1.msra.mxu0 0.0
    %2051 = vmatprep.subr.mxu0 0.0
    %2052 = vmatpush1.msra.mxu0 0.0
    %2053 = vmatprep.subr.mxu0 0.0
    %2054 = vmatpush1.msra.mxu0 0.0
    %2055 = vmatprep.subr.mxu0 0.0
    %2056 = vmatpush1.msra.mxu0 0.0
    %2057 = vmatprep.subr.mxu0 0.0
    %2058 = vmatpush1.msra.mxu0 0.0
    %2059 = vmatprep.subr.mxu0 0.0
    %2060 = vmatpush1.msra.mxu0 0.0
    %2061 = vmatprep.subr.mxu0 0.0
    %2062 = vmatpush1.msra.mxu0 0.0
    %2063 = vmatprep.subr.mxu0 0.0
    %2064 = vmatpush1.msra.mxu0 0.0
    %2065 = vmatprep.mubr.f32.mxu0 0.0
    %2066 = vmatmul.mubr.f32.gmra.mrb[0].mxu0 %v1999
    %v2067 = vpop.f32.mrb[0].mxu0
    %v2068 = vadd.f32 0.0, %v2067
    %v2069 = vpop.f32.mrb[0].mxu0
    %2070 = vdwg.mxu0
    %v2072 = vsel %vm226, %v2068, 0
    %2074 = vmatprep.subr.mxu0 0.0
    %2075 = vmatpush1.msra.mxu0 %v1109
    %2076 = vmatprep.subr.mxu0 0.0
    %2077 = vmatpush1.msra.mxu0 0.0
    %2078 = vmatprep.subr.mxu0 0.0
    %2079 = vmatpush1.msra.mxu0 0.0
    %2080 = vmatprep.subr.mxu0 0.0
    %2081 = vmatpush1.msra.mxu0 0.0
    %2082 = vmatprep.subr.mxu0 0.0
    %2083 = vmatpush1.msra.mxu0 0.0
    %2084 = vmatprep.subr.mxu0 0.0
    %2085 = vmatpush1.msra.mxu0 0.0
    %2086 = vmatprep.subr.mxu0 0.0
    %2087 = vmatpush1.msra.mxu0 0.0
    %2088 = vmatprep.subr.mxu0 0.0
    %2089 = vmatpush1.msra.mxu0 0.0
    %2090 = vmatprep.subr.mxu0 0.0
    %2091 = vmatpush1.msra.mxu0 0.0
    %2092 = vmatprep.subr.mxu0 0.0
    %2093 = vmatpush1.msra.mxu0 0.0
    %2094 = vmatprep.subr.mxu0 0.0
    %2095 = vmatpush1.msra.mxu0 0.0
    %2096 = vmatprep.subr.mxu0 0.0
    %2097 = vmatpush1.msra.mxu0 0.0
    %2098 = vmatprep.subr.mxu0 0.0
    %2099 = vmatpush1.msra.mxu0 0.0
    %2100 = vmatprep.subr.mxu0 0.0
    %2101 = vmatpush1.msra.mxu0 0.0
    %2102 = vmatprep.subr.mxu0 0.0
    %2103 = vmatpush1.msra.mxu0 0.0
    %2104 = vmatprep.subr.mxu0 0.0
    %2105 = vmatpush1.msra.mxu0 0.0
    %2106 = vmatprep.subr.mxu0 0.0
    %2107 = vmatpush1.msra.mxu0 0.0
    %2108 = vmatprep.subr.mxu0 0.0
    %2109 = vmatpush1.msra.mxu0 0.0
    %2110 = vmatprep.subr.mxu0 0.0
    %2111 = vmatpush1.msra.mxu0 0.0
    %2112 = vmatprep.subr.mxu0 0.0
    %2113 = vmatpush1.msra.mxu0 0.0
    %2114 = vmatprep.subr.mxu0 0.0
    %2115 = vmatpush1.msra.mxu0 0.0
    %2116 = vmatprep.subr.mxu0 0.0
    %2117 = vmatpush1.msra.mxu0 0.0
    %2118 = vmatprep.subr.mxu0 0.0
    %2119 = vmatpush1.msra.mxu0 0.0
    %2120 = vmatprep.subr.mxu0 0.0
    %2121 = vmatpush1.msra.mxu0 0.0
    %2122 = vmatprep.subr.mxu0 0.0
    %2123 = vmatpush1.msra.mxu0 0.0
    %2124 = vmatprep.subr.mxu0 0.0
    %2125 = vmatpush1.msra.mxu0 0.0
    %2126 = vmatprep.subr.mxu0 0.0
    %2127 = vmatpush1.msra.mxu0 0.0
    %2128 = vmatprep.subr.mxu0 0.0
    %2129 = vmatpush1.msra.mxu0 0.0
    %2130 = vmatprep.subr.mxu0 0.0
    %2131 = vmatpush1.msra.mxu0 0.0
    %2132 = vmatprep.subr.mxu0 0.0
    %2133 = vmatpush1.msra.mxu0 0.0
    %2134 = vmatprep.subr.mxu0 0.0
    %2135 = vmatpush1.msra.mxu0 0.0
    %2136 = vmatprep.subr.mxu0 0.0
    %2137 = vmatpush1.msra.mxu0 0.0
    %2138 = vmatprep.mubr.f32.mxu0 0.0
    %2139 = vmatmul.mubr.f32.gmra.mrb[0].mxu0 %v2072
    %v2140 = vpop.f32.mrb[0].mxu0
    %v2141 = vadd.f32 0.0, %v2140
    %v2142 = vpop.f32.mrb[0].mxu0
    %2143 = vdwg.mxu0
    %v2144 = vadd.f32 %v1905, %v2141
    %v2145 = vld [vmem:[%s7] sm:$0x1]
    %v2147 = vlaneseq
    %v2148 = vshrl.u32 %v2147, 7
    %v2149 = vsub.s32 0, %v2148
    %v2150 = vrot.slane %v2145, %v2149
    %v2152 = vadd.f32 %v1183, %v2150
    %v2153 = vadd.f32 %v2144, %v2150
    %v2154 = vadd.f32 %v62, %v2152
    %v2155 = vadd.f32 %v63, %v2153
    %v2156 = vld [vmem:[%s8] sm:$0x1]
    %v2157 = vld [vmem:[%s9] sm:$0x1]
    %v2158 = vsel %vm66, %v2154, 0.0
    %2159 = vadd.xlane.f32.xlu0 %v2158
    %v2160 = vpop.xlane.xlu0 %2159
    %v2161 = vsel %vm66, %v2155, 0.0
    %2162 = vadd.xlane.f32.xlu0 %v2161
    %v2163 = vpop.xlane.xlu0 %2162
    %v2164 = vmul.f32 %v2160, %v73
    %v2165 = vmul.f32 %v2163, %v73
    %v2166 = vsub.f32 %v2154, %v2164
    %v2167 = vsub.f32 %v2155, %v2165
    %v2168 = vmul.f32 %v2166, %v2166
    %v2169 = vmul.f32 %v2167, %v2167
    %v2170 = vsel %vm66, %v2168, 0.0
    %2171 = vadd.xlane.f32.xlu0 %v2170
    %v2172 = vpop.xlane.xlu0 %2171
    %v2173 = vsel %vm66, %v2169, 0.0
    %2174 = vadd.xlane.f32.xlu0 %v2173
    %v2175 = vpop.xlane.xlu0 %2174
    %v2176 = vmul.f32 %v2172, 0.032258064
    %v2177 = vmul.f32 %v2175, 0.032258064
    %v2178 = vrsqrt.pop %v2176
    %v2179 = vmul.f32 %v2176, %v2178
    %vm2180 = vcmp.eq.f32.partialorder %v2176, inf
    %v2181 = vsel %vm2180, %v2176, %v2179
    %vm2182 = vcmp.eq.f32.partialorder %v2176, 0.0
    %v2183 = vand.u32 %v2176, 2147483648
    %v2184 = vsel %vm2182, %v2183, %v2181
    %v2185 = vrsqrt.pop %v2177
    %v2186 = vmul.f32 %v2177, %v2185
    %vm2187 = vcmp.eq.f32.partialorder %v2177, inf
    %v2188 = vsel %vm2187, %v2177, %v2186
    %vm2189 = vcmp.eq.f32.partialorder %v2177, 0.0
    %v2190 = vand.u32 %v2177, 2147483648
    %v2191 = vsel %vm2189, %v2190, %v2188
    %v2193 = vlaneseq
    %v2194 = vshrl.u32 %v2193, 7
    %v2195 = vsub.s32 0, %v2194
    %v2196 = vrot.slane %v2156, %v2195
    %v2198 = vmul.f32 %v2196, %v2166
    %v2199 = vmul.f32 %v2196, %v2167
    %v2200 = vadd.f32 %v2184, 1e-06
    %v2201 = vadd.f32 %v2191, 1e-06
    %v2202 = vrcp.pop %v2200
    %v2203 = vmul.f32 %v2198, %v2202
    %v2204 = vrcp.pop %v2201
    %v2205 = vmul.f32 %v2199, %v2204
    %v2207 = vlaneseq
    %v2208 = vshrl.u32 %v2207, 7
    %v2209 = vsub.s32 0, %v2208
    %v2210 = vrot.slane %v2157, %v2209
    %v2212 = vadd.f32 %v2203, %v2210
    %v2213 = vadd.f32 %v2205, %v2210
    %v2214 = vld [vmem:[%s10] sm:$0xff]
    %v2215 = vld [vmem:[%s10 + $0x8] sm:$0xff]
    %v2216 = vld [vmem:[%s10 + $0x10] sm:$0xff]
    %v2217 = vld [vmem:[%s10 + $0x18] sm:$0xff]
    %v2218 = vld [vmem:[%s11] sm:$0x1]
    %v2220 = vlaneseq
    %v2221 = vshrl.u32 %v2220, 7
    %v2222 = vsub.s32 0, %v2221
    %v2223 = vrot.slane %v2218, %v2222
    %v2226 = vsel %vm66, %v2212, 0
    %v2229 = vsel %vm66, %v2213, 0
    %2231 = vmatprep.subr.mxu0 0.0
    %2232 = vmatpush1.msra.mxu0 %v2214
    %2233 = vmatprep.subr.mxu0 0.0
    %2234 = vmatpush1.msra.mxu0 %v2215
    %2235 = vmatprep.subr.mxu0 0.0
    %2236 = vmatpush1.msra.mxu0 %v2216
    %2237 = vmatprep.subr.mxu0 0.0
    %2238 = vmatpush1.msra.mxu0 %v2217
    %2239 = vmatprep.subr.mxu0 0.0
    %2240 = vmatpush1.msra.mxu0 0.0
    %2241 = vmatprep.subr.mxu0 0.0
    %2242 = vmatpush1.msra.mxu0 0.0
    %2243 = vmatprep.subr.mxu0 0.0
    %2244 = vmatpush1.msra.mxu0 0.0
    %2245 = vmatprep.subr.mxu0 0.0
    %2246 = vmatpush1.msra.mxu0 0.0
    %2247 = vmatprep.subr.mxu0 0.0
    %2248 = vmatpush1.msra.mxu0 0.0
    %2249 = vmatprep.subr.mxu0 0.0
    %2250 = vmatpush1.msra.mxu0 0.0
    %2251 = vmatprep.subr.mxu0 0.0
    %2252 = vmatpush1.msra.mxu0 0.0
    %2253 = vmatprep.subr.mxu0 0.0
    %2254 = vmatpush1.msra.mxu0 0.0
    %2255 = vmatprep.subr.mxu0 0.0
    %2256 = vmatpush1.msra.mxu0 0.0
    %2257 = vmatprep.subr.mxu0 0.0
    %2258 = vmatpush1.msra.mxu0 0.0
    %2259 = vmatprep.subr.mxu0 0.0
    %2260 = vmatpush1.msra.mxu0 0.0
    %2261 = vmatprep.subr.mxu0 0.0
    %2262 = vmatpush1.msra.mxu0 0.0
    %2263 = vmatprep.subr.mxu0 0.0
    %2264 = vmatpush1.msra.mxu0 0.0
    %2265 = vmatprep.subr.mxu0 0.0
    %2266 = vmatpush1.msra.mxu0 0.0
    %2267 = vmatprep.subr.mxu0 0.0
    %2268 = vmatpush1.msra.mxu0 0.0
    %2269 = vmatprep.subr.mxu0 0.0
    %2270 = vmatpush1.msra.mxu0 0.0
    %2271 = vmatprep.subr.mxu0 0.0
    %2272 = vmatpush1.msra.mxu0 0.0
    %2273 = vmatprep.subr.mxu0 0.0
    %2274 = vmatpush1.msra.mxu0 0.0
    %2275 = vmatprep.subr.mxu0 0.0
    %2276 = vmatpush1.msra.mxu0 0.0
    %2277 = vmatprep.subr.mxu0 0.0
    %2278 = vmatpush1.msra.mxu0 0.0
    %2279 = vmatprep.subr.mxu0 0.0
    %2280 = vmatpush1.msra.mxu0 0.0
    %2281 = vmatprep.subr.mxu0 0.0
    %2282 = vmatpush1.msra.mxu0 0.0
    %2283 = vmatprep.subr.mxu0 0.0
    %2284 = vmatpush1.msra.mxu0 0.0
    %2285 = vmatprep.subr.mxu0 0.0
    %2286 = vmatpush1.msra.mxu0 0.0
    %2287 = vmatprep.subr.mxu0 0.0
    %2288 = vmatpush1.msra.mxu0 0.0
    %2289 = vmatprep.subr.mxu0 0.0
    %2290 = vmatpush1.msra.mxu0 0.0
    %2291 = vmatprep.subr.mxu0 0.0
    %2292 = vmatpush1.msra.mxu0 0.0
    %2293 = vmatprep.subr.mxu0 0.0
    %2294 = vmatpush1.msra.mxu0 0.0
    %2295 = vmatprep.mubr.f32.mxu0 0.0
    %2296 = vmatmul.mubr.f32.gmra.mrb[0].mxu0 %v2226
    %v2297 = vpop.f32.mrb[0].mxu0
    %v2298 = vadd.f32 %v2223, %v2297
    %v2299 = vpop.f32.mrb[0].mxu0
    %2300 = vmatprep.mubr.f32.mxu0 0.0
    %2301 = vmatmul.mubr.f32.gmra.mrb[0].mxu0 %v2229
    %v2302 = vpop.f32.mrb[0].mxu0
    %v2303 = vadd.f32 %v2223, %v2302
    %v2304 = vpop.f32.mrb[0].mxu0
    %2305 = vdwg.mxu0
    %v2306 = vmax.f32 %v2298, 0.0
    %v2307 = vmax.f32 %v2303, 0.0
    %v2308 = vld [vmem:[%s12] sm:$0xff]
    %v2309 = vld [vmem:[%s12 + $0x8] sm:$0xff]
    %v2310 = vld [vmem:[%s12 + $0x10] sm:$0xff]
    %v2311 = vld [vmem:[%s12 + $0x18] sm:$0xff]
    %v2312 = vld [vmem:[%s12 + $0x20] sm:$0xff]
    %v2313 = vld [vmem:[%s12 + $0x28] sm:$0xff]
    %v2314 = vld [vmem:[%s12 + $0x30] sm:$0xff]
    %v2315 = vld [vmem:[%s12 + $0x38] sm:$0xff]
    %v2316 = vld [vmem:[%s13] sm:$0x1]
    %v2318 = vlaneseq
    %v2319 = vshrl.u32 %v2318, 7
    %v2320 = vsub.s32 0, %v2319
    %v2321 = vrot.slane %v2316, %v2320
    %vm2323 = vcmask 523264
    %v2325 = vsel %vm2323, %v2306, 0
    %v2328 = vsel %vm2323, %v2307, 0
    %2330 = vmatprep.subr.mxu0 0.0
    %2331 = vmatpush1.msra.mxu0 %v2308
    %2332 = vmatprep.subr.mxu0 0.0
    %2333 = vmatpush1.msra.mxu0 %v2309
    %2334 = vmatprep.subr.mxu0 0.0
    %2335 = vmatpush1.msra.mxu0 %v2310
    %2336 = vmatprep.subr.mxu0 0.0
    %2337 = vmatpush1.msra.mxu0 %v2311
    %2338 = vmatprep.subr.mxu0 0.0
    %2339 = vmatpush1.msra.mxu0 %v2312
    %2340 = vmatprep.subr.mxu0 0.0
    %2341 = vmatpush1.msra.mxu0 %v2313
    %2342 = vmatprep.subr.mxu0 0.0
    %2343 = vmatpush1.msra.mxu0 %v2314
    %2344 = vmatprep.subr.mxu0 0.0
    %2345 = vmatpush1.msra.mxu0 %v2315
    %2346 = vmatprep.subr.mxu0 0.0
    %2347 = vmatpush1.msra.mxu0 0.0
    %2348 = vmatprep.subr.mxu0 0.0
    %2349 = vmatpush1.msra.mxu0 0.0
    %2350 = vmatprep.subr.mxu0 0.0
    %2351 = vmatpush1.msra.mxu0 0.0
    %2352 = vmatprep.subr.mxu0 0.0
    %2353 = vmatpush1.msra.mxu0 0.0
    %2354 = vmatprep.subr.mxu0 0.0
    %2355 = vmatpush1.msra.mxu0 0.0
    %2356 = vmatprep.subr.mxu0 0.0
    %2357 = vmatpush1.msra.mxu0 0.0
    %2358 = vmatprep.subr.mxu0 0.0
    %2359 = vmatpush1.msra.mxu0 0.0
    %2360 = vmatprep.subr.mxu0 0.0
    %2361 = vmatpush1.msra.mxu0 0.0
    %2362 = vmatprep.subr.mxu0 0.0
    %2363 = vmatpush1.msra.mxu0 0.0
    %2364 = vmatprep.subr.mxu0 0.0
    %2365 = vmatpush1.msra.mxu0 0.0
    %2366 = vmatprep.subr.mxu0 0.0
    %2367 = vmatpush1.msra.mxu0 0.0
    %2368 = vmatprep.subr.mxu0 0.0
    %2369 = vmatpush1.msra.mxu0 0.0
    %2370 = vmatprep.subr.mxu0 0.0
    %2371 = vmatpush1.msra.mxu0 0.0
    %2372 = vmatprep.subr.mxu0 0.0
    %2373 = vmatpush1.msra.mxu0 0.0
    %2374 = vmatprep.subr.mxu0 0.0
    %2375 = vmatpush1.msra.mxu0 0.0
    %2376 = vmatprep.subr.mxu0 0.0
    %2377 = vmatpush1.msra.mxu0 0.0
    %2378 = vmatprep.subr.mxu0 0.0
    %2379 = vmatpush1.msra.mxu0 0.0
    %2380 = vmatprep.subr.mxu0 0.0
    %2381 = vmatpush1.msra.mxu0 0.0
    %2382 = vmatprep.subr.mxu0 0.0
    %2383 = vmatpush1.msra.mxu0 0.0
    %2384 = vmatprep.subr.mxu0 0.0
    %2385 = vmatpush1.msra.mxu0 0.0
    %2386 = vmatprep.subr.mxu0 0.0
    %2387 = vmatpush1.msra.mxu0 0.0
    %2388 = vmatprep.subr.mxu0 0.0
    %2389 = vmatpush1.msra.mxu0 0.0
    %2390 = vmatprep.subr.mxu0 0.0
    %2391 = vmatpush1.msra.mxu0 0.0
    %2392 = vmatprep.subr.mxu0 0.0
    %2393 = vmatpush1.msra.mxu0 0.0
    %2394 = vmatprep.mubr.f32.mxu0 0.0
    %2395 = vmatmul.mubr.f32.gmra.mrb[0].mxu0 %v2325
    %v2396 = vpop.f32.mrb[0].mxu0
    %v2397 = vadd.f32 %v2321, %v2396
    %v2398 = vpop.f32.mrb[0].mxu0
    %2399 = vmatprep.mubr.f32.mxu0 0.0
    %2400 = vmatmul.mubr.f32.gmra.mrb[0].mxu0 %v2328
    %v2401 = vpop.f32.mrb[0].mxu0
    %v2402 = vadd.f32 %v2321, %v2401
    %v2403 = vpop.f32.mrb[0].mxu0
    %2404 = vdwg.mxu0
    %v2405 = vadd.f32 %v2154, %v2397
    %v2406 = vadd.f32 %v2155, %v2402
    %2407 = vst.msk [vmem:[#allocation5] sm:$0xff] %vm66, %v2405
    %2408 = vst.msk [vmem:[#allocation5 + $0x8] sm:$0xff] %vm66, %v2406
    // Predicated region
    $region62: #{tpu_custom_call.1} parent=1 // pred_check
      _
    $region63: #{tpu_custom_call.1} parent=1 // pred_check_branch
      %2410 = sbr.rel (0) target = $region65
    $region64: #{tpu_custom_call.1} parent=1 // pred_region
      %s2412 = ssub.s32 256, 256
      %2413 = vsyncadd [#allocation4], %s2412
      %s2414 = sshll.u32 [#allocation5], 4
      %s2415 = int_to_ptr.vmem [resolvable:$true] %s2414
      %2420 = dma.vmem_to_hbm [thread:$0]  %s2415, 256, %s14, [#allocation4], 128, 128, 8
    $region65: #{tpu_custom_call.1} parent=1 // pred_fallthru
      _
    // Predicated region
    $region66: #{tpu_custom_call.1} parent=1 // pred_check
      _
    $region67: #{tpu_custom_call.1} parent=1 // pred_check_branch
      %2422 = sbr.rel (0) target = $region69
    $region68: #{tpu_custom_call.1} parent=1 // pred_region
      %2423 = dma.done [#allocation4], 256
    $region69: #{tpu_custom_call.1} parent=1 // pred_fallthru
      _
    %2424 = vsyncpa [#allocation3], 1
    %2425 = vsyncpa [#allocation4], 1

</llo_original>
